<compile_context>
chip_gen: v7x
topology: tpu7x:2x2x1
jax: 0.10.0
libtpu: 0.0.40
codegen_flags: <defaults>
</compile_context>

<pallas_src>
import functools

import jax
import jax.numpy as jnp
from jax.experimental import pallas as pl
from jax.experimental.pallas import tpu as pltpu


def _gather_kernel(fwd_ref, patches_hbm, o_ref, copy_sem, *, remain_t, bblk, tc):
    """Gather the kept rows of one (batch-block, C-block) tile straight from HBM.

    fwd_ref     : SMEM (T, B) int32          -- scalar-prefetched forward indexes
    patches_hbm : HBM  (T, B, C)             -- untiled input (memory_space=pl.ANY)
    o_ref       : VMEM (remain_t, bblk, tc)  -- auto-pipelined output block
    copy_sem    : DMA semaphores (bblk,) -- all copies of one batch column share a sem;
                  equal-sized copies make shared waits exact.
    """
    b0 = pl.program_id(0) * bblk
    c0 = pl.multiple_of(pl.program_id(1) * tc, tc)

    def row_copy(r, j):
        # r: kept-row index (python int or traced scalar); j: python-int batch offset.
        src_t = fwd_ref[r, b0 + j]                                      # SMEM scalar read
        return pltpu.make_async_copy(
            patches_hbm.at[src_t, pl.ds(b0 + j, 1), pl.ds(c0, tc)],    # (1, tc) in HBM
            o_ref.at[r, pl.ds(j, 1), :],                               # (1, tc) in VMEM
            copy_sem.at[j],
        )

    if remain_t * bblk <= 1024:
        # Fully static issue/wait: every DMA destination offset is a compile-time constant.
        copies = [row_copy(r, j) for j in range(bblk) for r in range(remain_t)]
        for cp in copies:
            cp.start()
        for cp in copies:
            cp.wait()
    else:
        # Bounded code size for very large remain_t * bblk (compile-time guard).
        for j in range(bblk):
            @pl.loop(0, remain_t)
            def _issue(r, j=j):
                row_copy(r, j).start()
        for j in range(bblk):
            @pl.loop(0, remain_t)
            def _drain(r, j=j):
                row_copy(0, j).wait()   # shape-identical descriptor; src index irrelevant


def _pick_tc(c, remain_t, bblk, itemsize, budget_bytes=12 * 1024 * 1024):
    """Largest lane-aligned C tile whose double-buffered output block fits the budget."""
    if c % 128 != 0:
        return c  # non-aligned C: keep the full dim (block dim == array dim is legal)
    per_lane = 2 * remain_t * bblk * itemsize          # double-buffered bytes per C lane
    if c * per_lane <= budget_bytes:
        return c
    best = 128
    for k in range(1, c // 128 + 1):
        cand = 128 * k
        if c % cand == 0 and cand * per_lane <= budget_bytes:
            best = cand
    return best


def patch_shuffle(patches, ratio, key, *, tc=None):
    """JAX/Pallas equivalent of PatchShuffle.forward.

    patches : (T, B, C) array
    ratio   : python float, fraction of tokens to drop
    key     : PRNG key controlling the per-batch permutations (deterministic)
    Returns (shuffled_patches (remain_T, B, C), forward_indexes (T, B) int32,
             backward_indexes (T, B) int32)
    """
    T, B, C = patches.shape
    remain_t = int(T * (1 - ratio))

    # --- index generation: one vectorized argsort instead of B permutation calls ---
    noise = jax.random.uniform(key, (T, B))
    fwd = jnp.argsort(noise, axis=0).astype(jnp.int32)    # per-batch permutation (T, B)
    bwd = jnp.argsort(fwd, axis=0).astype(jnp.int32)      # inverse permutation   (T, B)

    if remain_t <= 0:   # ratio ~ 1.0: nothing kept; avoid a zero-sized block dimension
        return jnp.zeros((0, B, C), patches.dtype), fwd, bwd

    # --- blocking ---
    # TODO(synk): for B % 8 != 0 and very large B, pad B up to a multiple of 8 instead
    # of taking the whole batch as a single block.
    bblk = 8 if B % 8 == 0 else B
    itemsize = jnp.dtype(patches.dtype).itemsize
    if tc is None:
        tc = _pick_tc(C, remain_t, bblk, itemsize)
    assert C % tc == 0, f"tc={tc} must divide C={C}"
    n_b, n_c = B // bblk, C // tc

    out_block_bytes = remain_t * bblk * tc * itemsize
    # VMEM request computed from the actual (double-buffered) block bytes + headroom,
    # clamped so it always fits v7x's 64 MiB physical VMEM.
    vmem_limit = int(min(max(2 * out_block_bytes + (8 << 20), 16 << 20), 60 << 20))

    kernel = functools.partial(_gather_kernel, remain_t=remain_t, bblk=bblk, tc=tc)

    shuffled = pl.pallas_call(
        kernel,
        out_shape=jax.ShapeDtypeStruct((remain_t, B, C), patches.dtype),
        grid_spec=pltpu.PrefetchScalarGridSpec(
            num_scalar_prefetch=1,                          # fwd lands in SMEM
            grid=(n_b, n_c),
            in_specs=[pl.BlockSpec(memory_space=pl.ANY)],   # patches stay in HBM
            out_specs=pl.BlockSpec((remain_t, bblk, tc),
                                   lambda i, ci, fwd_ref: (0, i, ci)),
            scratch_shapes=[pltpu.SemaphoreType.DMA((bblk,))],
        ),
        compiler_params=pltpu.CompilerParams(
            dimension_semantics=("parallel", "parallel"),   # both TCs usable on v7x
            vmem_limit_bytes=vmem_limit,
        ),
    )(fwd, patches)

    return shuffled, fwd, bwd


if __name__ == "__main__":
    root = jax.random.PRNGKey(0)
    k = jax.random.split(root, 4)

    def check(T, B, C, ratio, kd, kp, tc=None):
        patches = jax.random.normal(kd, (T, B, C), dtype=jnp.float32)
        shuffled, fwd, bwd = patch_shuffle(patches, ratio, kp, tc=tc)
        shuffled = jax.block_until_ready(shuffled)
        remain_t = int(T * (1 - ratio))

        # pure-JAX reference (torch.gather semantics along dim 0)
        full = jnp.take_along_axis(
            patches, jnp.broadcast_to(fwd[:, :, None], (T, B, C)), axis=0)
        ref = full[:remain_t]
        assert shuffled.shape == (remain_t, B, C)
        assert jnp.array_equal(shuffled, ref), "Pallas shuffle mismatch vs reference"

        # backward indexes really invert the forward permutation
        un = jnp.take_along_axis(
            full, jnp.broadcast_to(bwd[:, :, None], (T, B, C)), axis=0)
        assert jnp.array_equal(un, patches), "backward indexes do not invert forward"

    # MAE-style drop ratio; bblk=8 -> grid (2, 1)
    check(16, 16, 128, 0.75, k[0], k[1])
    # B not a multiple of 8 (bblk=B=4) and explicit C tiling (tc=128 -> grid (1, 2))
    check(8, 4, 256, 0.5, k[2], k[3], tc=128)

    print("KERNEL_OK")
</pallas_src>

<mosaic_0001>
module attributes {stable_mosaic.version = 11 : i64} {
  func.func @_gather_kernel(%arg0: i32, %arg1: i32, %arg2: memref<16x16xi32, #tpu.memory_space<smem>>, %arg3: memref<16x16x128xf32, #tpu.memory_space<any>>, %arg4: memref<4x8x128xf32, #tpu.memory_space<vmem>>, %arg5: memref<8x!tpu.dma_semaphore, #tpu.memory_space<semaphore_mem>>) attributes {dimension_semantics = [#tpu.dimension_semantics<parallel>, #tpu.dimension_semantics<parallel>], iteration_bounds = array<i64: 2, 1>, scalar_prefetch = 1 : i64, scratch_operands = 1 : i64, tpu.core_type = #tpu.core_type<tc>, window_params = [{}, {transform_indices = @transform_1, window_bounds = array<i64: 4, 8, 128>}]} {
    %c8_i32 = arith.constant 8 : i32
    %0 = arith.muli %arg0, %c8_i32 : i32
    %c128_i32 = arith.constant 128 : i32
    %1 = arith.muli %arg1, %c128_i32 : i32
    %2 = tpu.assume_multiple %1, 128 : i32
    %c0_i32 = arith.constant 0 : i32
    %3 = arith.addi %0, %c0_i32 : i32
    %c0 = arith.constant 0 : index
    %4 = arith.index_cast %3 : i32 to index
    %5 = memref.load %arg2[%c0, %4] : memref<16x16xi32, #tpu.memory_space<smem>>
    %c0_i32_0 = arith.constant 0 : i32
    %6 = arith.addi %0, %c0_i32_0 : i32
    %c0_i32_1 = arith.constant 0 : i32
    %7 = arith.addi %0, %c0_i32_1 : i32
    %c1 = arith.constant 1 : index
    %8 = arith.index_cast %7 : i32 to index
    %9 = memref.load %arg2[%c1, %8] : memref<16x16xi32, #tpu.memory_space<smem>>
    %c0_i32_2 = arith.constant 0 : i32
    %10 = arith.addi %0, %c0_i32_2 : i32
    %c0_i32_3 = arith.constant 0 : i32
    %11 = arith.addi %0, %c0_i32_3 : i32
    %c2 = arith.constant 2 : index
    %12 = arith.index_cast %11 : i32 to index
    %13 = memref.load %arg2[%c2, %12] : memref<16x16xi32, #tpu.memory_space<smem>>
    %c0_i32_4 = arith.constant 0 : i32
    %14 = arith.addi %0, %c0_i32_4 : i32
    %c0_i32_5 = arith.constant 0 : i32
    %15 = arith.addi %0, %c0_i32_5 : i32
    %c3 = arith.constant 3 : index
    %16 = arith.index_cast %15 : i32 to index
    %17 = memref.load %arg2[%c3, %16] : memref<16x16xi32, #tpu.memory_space<smem>>
    %c0_i32_6 = arith.constant 0 : i32
    %18 = arith.addi %0, %c0_i32_6 : i32
    %c1_i32 = arith.constant 1 : i32
    %19 = arith.addi %0, %c1_i32 : i32
    %c0_7 = arith.constant 0 : index
    %20 = arith.index_cast %19 : i32 to index
    %21 = memref.load %arg2[%c0_7, %20] : memref<16x16xi32, #tpu.memory_space<smem>>
    %c1_i32_8 = arith.constant 1 : i32
    %22 = arith.addi %0, %c1_i32_8 : i32
    %c1_i32_9 = arith.constant 1 : i32
    %23 = arith.addi %0, %c1_i32_9 : i32
    %c1_10 = arith.constant 1 : index
    %24 = arith.index_cast %23 : i32 to index
    %25 = memref.load %arg2[%c1_10, %24] : memref<16x16xi32, #tpu.memory_space<smem>>
    %c1_i32_11 = arith.constant 1 : i32
    %26 = arith.addi %0, %c1_i32_11 : i32
    %c1_i32_12 = arith.constant 1 : i32
    %27 = arith.addi %0, %c1_i32_12 : i32
    %c2_13 = arith.constant 2 : index
    %28 = arith.index_cast %27 : i32 to index
    %29 = memref.load %arg2[%c2_13, %28] : memref<16x16xi32, #tpu.memory_space<smem>>
    %c1_i32_14 = arith.constant 1 : i32
    %30 = arith.addi %0, %c1_i32_14 : i32
    %c1_i32_15 = arith.constant 1 : i32
    %31 = arith.addi %0, %c1_i32_15 : i32
    %c3_16 = arith.constant 3 : index
    %32 = arith.index_cast %31 : i32 to index
    %33 = memref.load %arg2[%c3_16, %32] : memref<16x16xi32, #tpu.memory_space<smem>>
    %c1_i32_17 = arith.constant 1 : i32
    %34 = arith.addi %0, %c1_i32_17 : i32
    %c2_i32 = arith.constant 2 : i32
    %35 = arith.addi %0, %c2_i32 : i32
    %c0_18 = arith.constant 0 : index
    %36 = arith.index_cast %35 : i32 to index
    %37 = memref.load %arg2[%c0_18, %36] : memref<16x16xi32, #tpu.memory_space<smem>>
    %c2_i32_19 = arith.constant 2 : i32
    %38 = arith.addi %0, %c2_i32_19 : i32
    %c2_i32_20 = arith.constant 2 : i32
    %39 = arith.addi %0, %c2_i32_20 : i32
    %c1_21 = arith.constant 1 : index
    %40 = arith.index_cast %39 : i32 to index
    %41 = memref.load %arg2[%c1_21, %40] : memref<16x16xi32, #tpu.memory_space<smem>>
    %c2_i32_22 = arith.constant 2 : i32
    %42 = arith.addi %0, %c2_i32_22 : i32
    %c2_i32_23 = arith.constant 2 : i32
    %43 = arith.addi %0, %c2_i32_23 : i32
    %c2_24 = arith.constant 2 : index
    %44 = arith.index_cast %43 : i32 to index
    %45 = memref.load %arg2[%c2_24, %44] : memref<16x16xi32, #tpu.memory_space<smem>>
    %c2_i32_25 = arith.constant 2 : i32
    %46 = arith.addi %0, %c2_i32_25 : i32
    %c2_i32_26 = arith.constant 2 : i32
    %47 = arith.addi %0, %c2_i32_26 : i32
    %c3_27 = arith.constant 3 : index
    %48 = arith.index_cast %47 : i32 to index
    %49 = memref.load %arg2[%c3_27, %48] : memref<16x16xi32, #tpu.memory_space<smem>>
    %c2_i32_28 = arith.constant 2 : i32
    %50 = arith.addi %0, %c2_i32_28 : i32
    %c3_i32 = arith.constant 3 : i32
    %51 = arith.addi %0, %c3_i32 : i32
    %c0_29 = arith.constant 0 : index
    %52 = arith.index_cast %51 : i32 to index
    %53 = memref.load %arg2[%c0_29, %52] : memref<16x16xi32, #tpu.memory_space<smem>>
    %c3_i32_30 = arith.constant 3 : i32
    %54 = arith.addi %0, %c3_i32_30 : i32
    %c3_i32_31 = arith.constant 3 : i32
    %55 = arith.addi %0, %c3_i32_31 : i32
    %c1_32 = arith.constant 1 : index
    %56 = arith.index_cast %55 : i32 to index
    %57 = memref.load %arg2[%c1_32, %56] : memref<16x16xi32, #tpu.memory_space<smem>>
    %c3_i32_33 = arith.constant 3 : i32
    %58 = arith.addi %0, %c3_i32_33 : i32
    %c3_i32_34 = arith.constant 3 : i32
    %59 = arith.addi %0, %c3_i32_34 : i32
    %c2_35 = arith.constant 2 : index
    %60 = arith.index_cast %59 : i32 to index
    %61 = memref.load %arg2[%c2_35, %60] : memref<16x16xi32, #tpu.memory_space<smem>>
    %c3_i32_36 = arith.constant 3 : i32
    %62 = arith.addi %0, %c3_i32_36 : i32
    %c3_i32_37 = arith.constant 3 : i32
    %63 = arith.addi %0, %c3_i32_37 : i32
    %c3_38 = arith.constant 3 : index
    %64 = arith.index_cast %63 : i32 to index
    %65 = memref.load %arg2[%c3_38, %64] : memref<16x16xi32, #tpu.memory_space<smem>>
    %c3_i32_39 = arith.constant 3 : i32
    %66 = arith.addi %0, %c3_i32_39 : i32
    %c4_i32 = arith.constant 4 : i32
    %67 = arith.addi %0, %c4_i32 : i32
    %c0_40 = arith.constant 0 : index
    %68 = arith.index_cast %67 : i32 to index
    %69 = memref.load %arg2[%c0_40, %68] : memref<16x16xi32, #tpu.memory_space<smem>>
    %c4_i32_41 = arith.constant 4 : i32
    %70 = arith.addi %0, %c4_i32_41 : i32
    %c4_i32_42 = arith.constant 4 : i32
    %71 = arith.addi %0, %c4_i32_42 : i32
    %c1_43 = arith.constant 1 : index
    %72 = arith.index_cast %71 : i32 to index
    %73 = memref.load %arg2[%c1_43, %72] : memref<16x16xi32, #tpu.memory_space<smem>>
    %c4_i32_44 = arith.constant 4 : i32
    %74 = arith.addi %0, %c4_i32_44 : i32
    %c4_i32_45 = arith.constant 4 : i32
    %75 = arith.addi %0, %c4_i32_45 : i32
    %c2_46 = arith.constant 2 : index
    %76 = arith.index_cast %75 : i32 to index
    %77 = memref.load %arg2[%c2_46, %76] : memref<16x16xi32, #tpu.memory_space<smem>>
    %c4_i32_47 = arith.constant 4 : i32
    %78 = arith.addi %0, %c4_i32_47 : i32
    %c4_i32_48 = arith.constant 4 : i32
    %79 = arith.addi %0, %c4_i32_48 : i32
    %c3_49 = arith.constant 3 : index
    %80 = arith.index_cast %79 : i32 to index
    %81 = memref.load %arg2[%c3_49, %80] : memref<16x16xi32, #tpu.memory_space<smem>>
    %c4_i32_50 = arith.constant 4 : i32
    %82 = arith.addi %0, %c4_i32_50 : i32
    %c5_i32 = arith.constant 5 : i32
    %83 = arith.addi %0, %c5_i32 : i32
    %c0_51 = arith.constant 0 : index
    %84 = arith.index_cast %83 : i32 to index
    %85 = memref.load %arg2[%c0_51, %84] : memref<16x16xi32, #tpu.memory_space<smem>>
    %c5_i32_52 = arith.constant 5 : i32
    %86 = arith.addi %0, %c5_i32_52 : i32
    %c5_i32_53 = arith.constant 5 : i32
    %87 = arith.addi %0, %c5_i32_53 : i32
    %c1_54 = arith.constant 1 : index
    %88 = arith.index_cast %87 : i32 to index
    %89 = memref.load %arg2[%c1_54, %88] : memref<16x16xi32, #tpu.memory_space<smem>>
    %c5_i32_55 = arith.constant 5 : i32
    %90 = arith.addi %0, %c5_i32_55 : i32
    %c5_i32_56 = arith.constant 5 : i32
    %91 = arith.addi %0, %c5_i32_56 : i32
    %c2_57 = arith.constant 2 : index
    %92 = arith.index_cast %91 : i32 to index
    %93 = memref.load %arg2[%c2_57, %92] : memref<16x16xi32, #tpu.memory_space<smem>>
    %c5_i32_58 = arith.constant 5 : i32
    %94 = arith.addi %0, %c5_i32_58 : i32
    %c5_i32_59 = arith.constant 5 : i32
    %95 = arith.addi %0, %c5_i32_59 : i32
    %c3_60 = arith.constant 3 : index
    %96 = arith.index_cast %95 : i32 to index
    %97 = memref.load %arg2[%c3_60, %96] : memref<16x16xi32, #tpu.memory_space<smem>>
    %c5_i32_61 = arith.constant 5 : i32
    %98 = arith.addi %0, %c5_i32_61 : i32
    %c6_i32 = arith.constant 6 : i32
    %99 = arith.addi %0, %c6_i32 : i32
    %c0_62 = arith.constant 0 : index
    %100 = arith.index_cast %99 : i32 to index
    %101 = memref.load %arg2[%c0_62, %100] : memref<16x16xi32, #tpu.memory_space<smem>>
    %c6_i32_63 = arith.constant 6 : i32
    %102 = arith.addi %0, %c6_i32_63 : i32
    %c6_i32_64 = arith.constant 6 : i32
    %103 = arith.addi %0, %c6_i32_64 : i32
    %c1_65 = arith.constant 1 : index
    %104 = arith.index_cast %103 : i32 to index
    %105 = memref.load %arg2[%c1_65, %104] : memref<16x16xi32, #tpu.memory_space<smem>>
    %c6_i32_66 = arith.constant 6 : i32
    %106 = arith.addi %0, %c6_i32_66 : i32
    %c6_i32_67 = arith.constant 6 : i32
    %107 = arith.addi %0, %c6_i32_67 : i32
    %c2_68 = arith.constant 2 : index
    %108 = arith.index_cast %107 : i32 to index
    %109 = memref.load %arg2[%c2_68, %108] : memref<16x16xi32, #tpu.memory_space<smem>>
    %c6_i32_69 = arith.constant 6 : i32
    %110 = arith.addi %0, %c6_i32_69 : i32
    %c6_i32_70 = arith.constant 6 : i32
    %111 = arith.addi %0, %c6_i32_70 : i32
    %c3_71 = arith.constant 3 : index
    %112 = arith.index_cast %111 : i32 to index
    %113 = memref.load %arg2[%c3_71, %112] : memref<16x16xi32, #tpu.memory_space<smem>>
    %c6_i32_72 = arith.constant 6 : i32
    %114 = arith.addi %0, %c6_i32_72 : i32
    %c7_i32 = arith.constant 7 : i32
    %115 = arith.addi %0, %c7_i32 : i32
    %c0_73 = arith.constant 0 : index
    %116 = arith.index_cast %115 : i32 to index
    %117 = memref.load %arg2[%c0_73, %116] : memref<16x16xi32, #tpu.memory_space<smem>>
    %c7_i32_74 = arith.constant 7 : i32
    %118 = arith.addi %0, %c7_i32_74 : i32
    %c7_i32_75 = arith.constant 7 : i32
    %119 = arith.addi %0, %c7_i32_75 : i32
    %c1_76 = arith.constant 1 : index
    %120 = arith.index_cast %119 : i32 to index
    %121 = memref.load %arg2[%c1_76, %120] : memref<16x16xi32, #tpu.memory_space<smem>>
    %c7_i32_77 = arith.constant 7 : i32
    %122 = arith.addi %0, %c7_i32_77 : i32
    %c7_i32_78 = arith.constant 7 : i32
    %123 = arith.addi %0, %c7_i32_78 : i32
    %c2_79 = arith.constant 2 : index
    %124 = arith.index_cast %123 : i32 to index
    %125 = memref.load %arg2[%c2_79, %124] : memref<16x16xi32, #tpu.memory_space<smem>>
    %c7_i32_80 = arith.constant 7 : i32
    %126 = arith.addi %0, %c7_i32_80 : i32
    %c7_i32_81 = arith.constant 7 : i32
    %127 = arith.addi %0, %c7_i32_81 : i32
    %c3_82 = arith.constant 3 : index
    %128 = arith.index_cast %127 : i32 to index
    %129 = memref.load %arg2[%c3_82, %128] : memref<16x16xi32, #tpu.memory_space<smem>>
    %c7_i32_83 = arith.constant 7 : i32
    %130 = arith.addi %0, %c7_i32_83 : i32
    %c0_i32_84 = arith.constant 0 : i32
    %c0_i32_85 = arith.constant 0 : i32
    %131 = tpu.memref_slice %arg3[%5, %6, %2] : memref<16x16x128xf32, #tpu.memory_space<any>> -> memref<1x1x128xf32, #tpu.memory_space<any>>
    %132 = tpu.memref_squeeze %131 : memref<1x1x128xf32, #tpu.memory_space<any>> -> memref<1x128xf32, #tpu.memory_space<any>>
    %c0_i32_86 = arith.constant 0 : i32
    %c0_i32_87 = arith.constant 0 : i32
    %133 = tpu.memref_slice %arg4[%c0_i32_84, %c0_i32_86, %c0_i32_87] : memref<4x8x128xf32, #tpu.memory_space<vmem>> -> memref<1x1x128xf32, #tpu.memory_space<vmem>>
    %134 = tpu.memref_squeeze %133 : memref<1x1x128xf32, #tpu.memory_space<vmem>> -> memref<1x128xf32, #tpu.memory_space<vmem>>
    %135 = tpu.memref_slice %arg5[%c0_i32_85] : memref<8x!tpu.dma_semaphore, #tpu.memory_space<semaphore_mem>> -> memref<1x!tpu.dma_semaphore, #tpu.memory_space<semaphore_mem>>
    %136 = tpu.memref_squeeze %135 : memref<1x!tpu.dma_semaphore, #tpu.memory_space<semaphore_mem>> -> memref<!tpu.dma_semaphore, #tpu.memory_space<semaphore_mem>>
    tpu.enqueue_dma source(%132 : memref<1x128xf32, #tpu.memory_space<any>>) target(%134 : memref<1x128xf32, #tpu.memory_space<vmem>>) target_semaphore(%136 : memref<!tpu.dma_semaphore, #tpu.memory_space<semaphore_mem>>)
    %c1_i32_88 = arith.constant 1 : i32
    %c0_i32_89 = arith.constant 0 : i32
    %137 = tpu.memref_slice %arg3[%9, %10, %2] : memref<16x16x128xf32, #tpu.memory_space<any>> -> memref<1x1x128xf32, #tpu.memory_space<any>>
    %138 = tpu.memref_squeeze %137 : memref<1x1x128xf32, #tpu.memory_space<any>> -> memref<1x128xf32, #tpu.memory_space<any>>
    %c0_i32_90 = arith.constant 0 : i32
    %c0_i32_91 = arith.constant 0 : i32
    %139 = tpu.memref_slice %arg4[%c1_i32_88, %c0_i32_90, %c0_i32_91] : memref<4x8x128xf32, #tpu.memory_space<vmem>> -> memref<1x1x128xf32, #tpu.memory_space<vmem>>
    %140 = tpu.memref_squeeze %139 : memref<1x1x128xf32, #tpu.memory_space<vmem>> -> memref<1x128xf32, #tpu.memory_space<vmem>>
    %141 = tpu.memref_slice %arg5[%c0_i32_89] : memref<8x!tpu.dma_semaphore, #tpu.memory_space<semaphore_mem>> -> memref<1x!tpu.dma_semaphore, #tpu.memory_space<semaphore_mem>>
    %142 = tpu.memref_squeeze %141 : memref<1x!tpu.dma_semaphore, #tpu.memory_space<semaphore_mem>> -> memref<!tpu.dma_semaphore, #tpu.memory_space<semaphore_mem>>
    tpu.enqueue_dma source(%138 : memref<1x128xf32, #tpu.memory_space<any>>) target(%140 : memref<1x128xf32, #tpu.memory_space<vmem>>) target_semaphore(%142 : memref<!tpu.dma_semaphore, #tpu.memory_space<semaphore_mem>>)
    %c2_i32_92 = arith.constant 2 : i32
    %c0_i32_93 = arith.constant 0 : i32
    %143 = tpu.memref_slice %arg3[%13, %14, %2] : memref<16x16x128xf32, #tpu.memory_space<any>> -> memref<1x1x128xf32, #tpu.memory_space<any>>
    %144 = tpu.memref_squeeze %143 : memref<1x1x128xf32, #tpu.memory_space<any>> -> memref<1x128xf32, #tpu.memory_space<any>>
    %c0_i32_94 = arith.constant 0 : i32
    %c0_i32_95 = arith.constant 0 : i32
    %145 = tpu.memref_slice %arg4[%c2_i32_92, %c0_i32_94, %c0_i32_95] : memref<4x8x128xf32, #tpu.memory_space<vmem>> -> memref<1x1x128xf32, #tpu.memory_space<vmem>>
    %146 = tpu.memref_squeeze %145 : memref<1x1x128xf32, #tpu.memory_space<vmem>> -> memref<1x128xf32, #tpu.memory_space<vmem>>
    %147 = tpu.memref_slice %arg5[%c0_i32_93] : memref<8x!tpu.dma_semaphore, #tpu.memory_space<semaphore_mem>> -> memref<1x!tpu.dma_semaphore, #tpu.memory_space<semaphore_mem>>
    %148 = tpu.memref_squeeze %147 : memref<1x!tpu.dma_semaphore, #tpu.memory_space<semaphore_mem>> -> memref<!tpu.dma_semaphore, #tpu.memory_space<semaphore_mem>>
    tpu.enqueue_dma source(%144 : memref<1x128xf32, #tpu.memory_space<any>>) target(%146 : memref<1x128xf32, #tpu.memory_space<vmem>>) target_semaphore(%148 : memref<!tpu.dma_semaphore, #tpu.memory_space<semaphore_mem>>)
    %c3_i32_96 = arith.constant 3 : i32
    %c0_i32_97 = arith.constant 0 : i32
    %149 = tpu.memref_slice %arg3[%17, %18, %2] : memref<16x16x128xf32, #tpu.memory_space<any>> -> memref<1x1x128xf32, #tpu.memory_space<any>>
    %150 = tpu.memref_squeeze %149 : memref<1x1x128xf32, #tpu.memory_space<any>> -> memref<1x128xf32, #tpu.memory_space<any>>
    %c0_i32_98 = arith.constant 0 : i32
    %c0_i32_99 = arith.constant 0 : i32
    %151 = tpu.memref_slice %arg4[%c3_i32_96, %c0_i32_98, %c0_i32_99] : memref<4x8x128xf32, #tpu.memory_space<vmem>> -> memref<1x1x128xf32, #tpu.memory_space<vmem>>
    %152 = tpu.memref_squeeze %151 : memref<1x1x128xf32, #tpu.memory_space<vmem>> -> memref<1x128xf32, #tpu.memory_space<vmem>>
    %153 = tpu.memref_slice %arg5[%c0_i32_97] : memref<8x!tpu.dma_semaphore, #tpu.memory_space<semaphore_mem>> -> memref<1x!tpu.dma_semaphore, #tpu.memory_space<semaphore_mem>>
    %154 = tpu.memref_squeeze %153 : memref<1x!tpu.dma_semaphore, #tpu.memory_space<semaphore_mem>> -> memref<!tpu.dma_semaphore, #tpu.memory_space<semaphore_mem>>
    tpu.enqueue_dma source(%150 : memref<1x128xf32, #tpu.memory_space<any>>) target(%152 : memref<1x128xf32, #tpu.memory_space<vmem>>) target_semaphore(%154 : memref<!tpu.dma_semaphore, #tpu.memory_space<semaphore_mem>>)
    %c0_i32_100 = arith.constant 0 : i32
    %c1_i32_101 = arith.constant 1 : i32
    %155 = tpu.memref_slice %arg3[%21, %22, %2] : memref<16x16x128xf32, #tpu.memory_space<any>> -> memref<1x1x128xf32, #tpu.memory_space<any>>
    %156 = tpu.memref_squeeze %155 : memref<1x1x128xf32, #tpu.memory_space<any>> -> memref<1x128xf32, #tpu.memory_space<any>>
    %c1_i32_102 = arith.constant 1 : i32
    %c0_i32_103 = arith.constant 0 : i32
    %157 = tpu.memref_slice %arg4[%c0_i32_100, %c1_i32_102, %c0_i32_103] : memref<4x8x128xf32, #tpu.memory_space<vmem>> -> memref<1x1x128xf32, #tpu.memory_space<vmem>>
    %158 = tpu.memref_squeeze %157 : memref<1x1x128xf32, #tpu.memory_space<vmem>> -> memref<1x128xf32, #tpu.memory_space<vmem>>
    %159 = tpu.memref_slice %arg5[%c1_i32_101] : memref<8x!tpu.dma_semaphore, #tpu.memory_space<semaphore_mem>> -> memref<1x!tpu.dma_semaphore, #tpu.memory_space<semaphore_mem>>
    %160 = tpu.memref_squeeze %159 : memref<1x!tpu.dma_semaphore, #tpu.memory_space<semaphore_mem>> -> memref<!tpu.dma_semaphore, #tpu.memory_space<semaphore_mem>>
    tpu.enqueue_dma source(%156 : memref<1x128xf32, #tpu.memory_space<any>>) target(%158 : memref<1x128xf32, #tpu.memory_space<vmem>>) target_semaphore(%160 : memref<!tpu.dma_semaphore, #tpu.memory_space<semaphore_mem>>)
    %c1_i32_104 = arith.constant 1 : i32
    %c1_i32_105 = arith.constant 1 : i32
    %161 = tpu.memref_slice %arg3[%25, %26, %2] : memref<16x16x128xf32, #tpu.memory_space<any>> -> memref<1x1x128xf32, #tpu.memory_space<any>>
    %162 = tpu.memref_squeeze %161 : memref<1x1x128xf32, #tpu.memory_space<any>> -> memref<1x128xf32, #tpu.memory_space<any>>
    %c1_i32_106 = arith.constant 1 : i32
    %c0_i32_107 = arith.constant 0 : i32
    %163 = tpu.memref_slice %arg4[%c1_i32_104, %c1_i32_106, %c0_i32_107] : memref<4x8x128xf32, #tpu.memory_space<vmem>> -> memref<1x1x128xf32, #tpu.memory_space<vmem>>
    %164 = tpu.memref_squeeze %163 : memref<1x1x128xf32, #tpu.memory_space<vmem>> -> memref<1x128xf32, #tpu.memory_space<vmem>>
    %165 = tpu.memref_slice %arg5[%c1_i32_105] : memref<8x!tpu.dma_semaphore, #tpu.memory_space<semaphore_mem>> -> memref<1x!tpu.dma_semaphore, #tpu.memory_space<semaphore_mem>>
    %166 = tpu.memref_squeeze %165 : memref<1x!tpu.dma_semaphore, #tpu.memory_space<semaphore_mem>> -> memref<!tpu.dma_semaphore, #tpu.memory_space<semaphore_mem>>
    tpu.enqueue_dma source(%162 : memref<1x128xf32, #tpu.memory_space<any>>) target(%164 : memref<1x128xf32, #tpu.memory_space<vmem>>) target_semaphore(%166 : memref<!tpu.dma_semaphore, #tpu.memory_space<semaphore_mem>>)
    %c2_i32_108 = arith.constant 2 : i32
    %c1_i32_109 = arith.constant 1 : i32
    %167 = tpu.memref_slice %arg3[%29, %30, %2] : memref<16x16x128xf32, #tpu.memory_space<any>> -> memref<1x1x128xf32, #tpu.memory_space<any>>
    %168 = tpu.memref_squeeze %167 : memref<1x1x128xf32, #tpu.memory_space<any>> -> memref<1x128xf32, #tpu.memory_space<any>>
    %c1_i32_110 = arith.constant 1 : i32
    %c0_i32_111 = arith.constant 0 : i32
    %169 = tpu.memref_slice %arg4[%c2_i32_108, %c1_i32_110, %c0_i32_111] : memref<4x8x128xf32, #tpu.memory_space<vmem>> -> memref<1x1x128xf32, #tpu.memory_space<vmem>>
    %170 = tpu.memref_squeeze %169 : memref<1x1x128xf32, #tpu.memory_space<vmem>> -> memref<1x128xf32, #tpu.memory_space<vmem>>
    %171 = tpu.memref_slice %arg5[%c1_i32_109] : memref<8x!tpu.dma_semaphore, #tpu.memory_space<semaphore_mem>> -> memref<1x!tpu.dma_semaphore, #tpu.memory_space<semaphore_mem>>
    %172 = tpu.memref_squeeze %171 : memref<1x!tpu.dma_semaphore, #tpu.memory_space<semaphore_mem>> -> memref<!tpu.dma_semaphore, #tpu.memory_space<semaphore_mem>>
    tpu.enqueue_dma source(%168 : memref<1x128xf32, #tpu.memory_space<any>>) target(%170 : memref<1x128xf32, #tpu.memory_space<vmem>>) target_semaphore(%172 : memref<!tpu.dma_semaphore, #tpu.memory_space<semaphore_mem>>)
    %c3_i32_112 = arith.constant 3 : i32
    %c1_i32_113 = arith.constant 1 : i32
    %173 = tpu.memref_slice %arg3[%33, %34, %2] : memref<16x16x128xf32, #tpu.memory_space<any>> -> memref<1x1x128xf32, #tpu.memory_space<any>>
    %174 = tpu.memref_squeeze %173 : memref<1x1x128xf32, #tpu.memory_space<any>> -> memref<1x128xf32, #tpu.memory_space<any>>
    %c1_i32_114 = arith.constant 1 : i32
    %c0_i32_115 = arith.constant 0 : i32
    %175 = tpu.memref_slice %arg4[%c3_i32_112, %c1_i32_114, %c0_i32_115] : memref<4x8x128xf32, #tpu.memory_space<vmem>> -> memref<1x1x128xf32, #tpu.memory_space<vmem>>
    %176 = tpu.memref_squeeze %175 : memref<1x1x128xf32, #tpu.memory_space<vmem>> -> memref<1x128xf32, #tpu.memory_space<vmem>>
    %177 = tpu.memref_slice %arg5[%c1_i32_113] : memref<8x!tpu.dma_semaphore, #tpu.memory_space<semaphore_mem>> -> memref<1x!tpu.dma_semaphore, #tpu.memory_space<semaphore_mem>>
    %178 = tpu.memref_squeeze %177 : memref<1x!tpu.dma_semaphore, #tpu.memory_space<semaphore_mem>> -> memref<!tpu.dma_semaphore, #tpu.memory_space<semaphore_mem>>
    tpu.enqueue_dma source(%174 : memref<1x128xf32, #tpu.memory_space<any>>) target(%176 : memref<1x128xf32, #tpu.memory_space<vmem>>) target_semaphore(%178 : memref<!tpu.dma_semaphore, #tpu.memory_space<semaphore_mem>>)
    %c0_i32_116 = arith.constant 0 : i32
    %c2_i32_117 = arith.constant 2 : i32
    %179 = tpu.memref_slice %arg3[%37, %38, %2] : memref<16x16x128xf32, #tpu.memory_space<any>> -> memref<1x1x128xf32, #tpu.memory_space<any>>
    %180 = tpu.memref_squeeze %179 : memref<1x1x128xf32, #tpu.memory_space<any>> -> memref<1x128xf32, #tpu.memory_space<any>>
    %c2_i32_118 = arith.constant 2 : i32
    %c0_i32_119 = arith.constant 0 : i32
    %181 = tpu.memref_slice %arg4[%c0_i32_116, %c2_i32_118, %c0_i32_119] : memref<4x8x128xf32, #tpu.memory_space<vmem>> -> memref<1x1x128xf32, #tpu.memory_space<vmem>>
    %182 = tpu.memref_squeeze %181 : memref<1x1x128xf32, #tpu.memory_space<vmem>> -> memref<1x128xf32, #tpu.memory_space<vmem>>
    %183 = tpu.memref_slice %arg5[%c2_i32_117] : memref<8x!tpu.dma_semaphore, #tpu.memory_space<semaphore_mem>> -> memref<1x!tpu.dma_semaphore, #tpu.memory_space<semaphore_mem>>
    %184 = tpu.memref_squeeze %183 : memref<1x!tpu.dma_semaphore, #tpu.memory_space<semaphore_mem>> -> memref<!tpu.dma_semaphore, #tpu.memory_space<semaphore_mem>>
    tpu.enqueue_dma source(%180 : memref<1x128xf32, #tpu.memory_space<any>>) target(%182 : memref<1x128xf32, #tpu.memory_space<vmem>>) target_semaphore(%184 : memref<!tpu.dma_semaphore, #tpu.memory_space<semaphore_mem>>)
    %c1_i32_120 = arith.constant 1 : i32
    %c2_i32_121 = arith.constant 2 : i32
    %185 = tpu.memref_slice %arg3[%41, %42, %2] : memref<16x16x128xf32, #tpu.memory_space<any>> -> memref<1x1x128xf32, #tpu.memory_space<any>>
    %186 = tpu.memref_squeeze %185 : memref<1x1x128xf32, #tpu.memory_space<any>> -> memref<1x128xf32, #tpu.memory_space<any>>
    %c2_i32_122 = arith.constant 2 : i32
    %c0_i32_123 = arith.constant 0 : i32
    %187 = tpu.memref_slice %arg4[%c1_i32_120, %c2_i32_122, %c0_i32_123] : memref<4x8x128xf32, #tpu.memory_space<vmem>> -> memref<1x1x128xf32, #tpu.memory_space<vmem>>
    %188 = tpu.memref_squeeze %187 : memref<1x1x128xf32, #tpu.memory_space<vmem>> -> memref<1x128xf32, #tpu.memory_space<vmem>>
    %189 = tpu.memref_slice %arg5[%c2_i32_121] : memref<8x!tpu.dma_semaphore, #tpu.memory_space<semaphore_mem>> -> memref<1x!tpu.dma_semaphore, #tpu.memory_space<semaphore_mem>>
    %190 = tpu.memref_squeeze %189 : memref<1x!tpu.dma_semaphore, #tpu.memory_space<semaphore_mem>> -> memref<!tpu.dma_semaphore, #tpu.memory_space<semaphore_mem>>
    tpu.enqueue_dma source(%186 : memref<1x128xf32, #tpu.memory_space<any>>) target(%188 : memref<1x128xf32, #tpu.memory_space<vmem>>) target_semaphore(%190 : memref<!tpu.dma_semaphore, #tpu.memory_space<semaphore_mem>>)
    %c2_i32_124 = arith.constant 2 : i32
    %c2_i32_125 = arith.constant 2 : i32
    %191 = tpu.memref_slice %arg3[%45, %46, %2] : memref<16x16x128xf32, #tpu.memory_space<any>> -> memref<1x1x128xf32, #tpu.memory_space<any>>
    %192 = tpu.memref_squeeze %191 : memref<1x1x128xf32, #tpu.memory_space<any>> -> memref<1x128xf32, #tpu.memory_space<any>>
    %c2_i32_126 = arith.constant 2 : i32
    %c0_i32_127 = arith.constant 0 : i32
    %193 = tpu.memref_slice %arg4[%c2_i32_124, %c2_i32_126, %c0_i32_127] : memref<4x8x128xf32, #tpu.memory_space<vmem>> -> memref<1x1x128xf32, #tpu.memory_space<vmem>>
    %194 = tpu.memref_squeeze %193 : memref<1x1x128xf32, #tpu.memory_space<vmem>> -> memref<1x128xf32, #tpu.memory_space<vmem>>
    %195 = tpu.memref_slice %arg5[%c2_i32_125] : memref<8x!tpu.dma_semaphore, #tpu.memory_space<semaphore_mem>> -> memref<1x!tpu.dma_semaphore, #tpu.memory_space<semaphore_mem>>
    %196 = tpu.memref_squeeze %195 : memref<1x!tpu.dma_semaphore, #tpu.memory_space<semaphore_mem>> -> memref<!tpu.dma_semaphore, #tpu.memory_space<semaphore_mem>>
    tpu.enqueue_dma source(%192 : memref<1x128xf32, #tpu.memory_space<any>>) target(%194 : memref<1x128xf32, #tpu.memory_space<vmem>>) target_semaphore(%196 : memref<!tpu.dma_semaphore, #tpu.memory_space<semaphore_mem>>)
    %c3_i32_128 = arith.constant 3 : i32
    %c2_i32_129 = arith.constant 2 : i32
    %197 = tpu.memref_slice %arg3[%49, %50, %2] : memref<16x16x128xf32, #tpu.memory_space<any>> -> memref<1x1x128xf32, #tpu.memory_space<any>>
    %198 = tpu.memref_squeeze %197 : memref<1x1x128xf32, #tpu.memory_space<any>> -> memref<1x128xf32, #tpu.memory_space<any>>
    %c2_i32_130 = arith.constant 2 : i32
    %c0_i32_131 = arith.constant 0 : i32
    %199 = tpu.memref_slice %arg4[%c3_i32_128, %c2_i32_130, %c0_i32_131] : memref<4x8x128xf32, #tpu.memory_space<vmem>> -> memref<1x1x128xf32, #tpu.memory_space<vmem>>
    %200 = tpu.memref_squeeze %199 : memref<1x1x128xf32, #tpu.memory_space<vmem>> -> memref<1x128xf32, #tpu.memory_space<vmem>>
    %201 = tpu.memref_slice %arg5[%c2_i32_129] : memref<8x!tpu.dma_semaphore, #tpu.memory_space<semaphore_mem>> -> memref<1x!tpu.dma_semaphore, #tpu.memory_space<semaphore_mem>>
    %202 = tpu.memref_squeeze %201 : memref<1x!tpu.dma_semaphore, #tpu.memory_space<semaphore_mem>> -> memref<!tpu.dma_semaphore, #tpu.memory_space<semaphore_mem>>
    tpu.enqueue_dma source(%198 : memref<1x128xf32, #tpu.memory_space<any>>) target(%200 : memref<1x128xf32, #tpu.memory_space<vmem>>) target_semaphore(%202 : memref<!tpu.dma_semaphore, #tpu.memory_space<semaphore_mem>>)
    %c0_i32_132 = arith.constant 0 : i32
    %c3_i32_133 = arith.constant 3 : i32
    %203 = tpu.memref_slice %arg3[%53, %54, %2] : memref<16x16x128xf32, #tpu.memory_space<any>> -> memref<1x1x128xf32, #tpu.memory_space<any>>
    %204 = tpu.memref_squeeze %203 : memref<1x1x128xf32, #tpu.memory_space<any>> -> memref<1x128xf32, #tpu.memory_space<any>>
    %c3_i32_134 = arith.constant 3 : i32
    %c0_i32_135 = arith.constant 0 : i32
    %205 = tpu.memref_slice %arg4[%c0_i32_132, %c3_i32_134, %c0_i32_135] : memref<4x8x128xf32, #tpu.memory_space<vmem>> -> memref<1x1x128xf32, #tpu.memory_space<vmem>>
    %206 = tpu.memref_squeeze %205 : memref<1x1x128xf32, #tpu.memory_space<vmem>> -> memref<1x128xf32, #tpu.memory_space<vmem>>
    %207 = tpu.memref_slice %arg5[%c3_i32_133] : memref<8x!tpu.dma_semaphore, #tpu.memory_space<semaphore_mem>> -> memref<1x!tpu.dma_semaphore, #tpu.memory_space<semaphore_mem>>
    %208 = tpu.memref_squeeze %207 : memref<1x!tpu.dma_semaphore, #tpu.memory_space<semaphore_mem>> -> memref<!tpu.dma_semaphore, #tpu.memory_space<semaphore_mem>>
    tpu.enqueue_dma source(%204 : memref<1x128xf32, #tpu.memory_space<any>>) target(%206 : memref<1x128xf32, #tpu.memory_space<vmem>>) target_semaphore(%208 : memref<!tpu.dma_semaphore, #tpu.memory_space<semaphore_mem>>)
    %c1_i32_136 = arith.constant 1 : i32
    %c3_i32_137 = arith.constant 3 : i32
    %209 = tpu.memref_slice %arg3[%57, %58, %2] : memref<16x16x128xf32, #tpu.memory_space<any>> -> memref<1x1x128xf32, #tpu.memory_space<any>>
    %210 = tpu.memref_squeeze %209 : memref<1x1x128xf32, #tpu.memory_space<any>> -> memref<1x128xf32, #tpu.memory_space<any>>
    %c3_i32_138 = arith.constant 3 : i32
    %c0_i32_139 = arith.constant 0 : i32
    %211 = tpu.memref_slice %arg4[%c1_i32_136, %c3_i32_138, %c0_i32_139] : memref<4x8x128xf32, #tpu.memory_space<vmem>> -> memref<1x1x128xf32, #tpu.memory_space<vmem>>
    %212 = tpu.memref_squeeze %211 : memref<1x1x128xf32, #tpu.memory_space<vmem>> -> memref<1x128xf32, #tpu.memory_space<vmem>>
    %213 = tpu.memref_slice %arg5[%c3_i32_137] : memref<8x!tpu.dma_semaphore, #tpu.memory_space<semaphore_mem>> -> memref<1x!tpu.dma_semaphore, #tpu.memory_space<semaphore_mem>>
    %214 = tpu.memref_squeeze %213 : memref<1x!tpu.dma_semaphore, #tpu.memory_space<semaphore_mem>> -> memref<!tpu.dma_semaphore, #tpu.memory_space<semaphore_mem>>
    tpu.enqueue_dma source(%210 : memref<1x128xf32, #tpu.memory_space<any>>) target(%212 : memref<1x128xf32, #tpu.memory_space<vmem>>) target_semaphore(%214 : memref<!tpu.dma_semaphore, #tpu.memory_space<semaphore_mem>>)
    %c2_i32_140 = arith.constant 2 : i32
    %c3_i32_141 = arith.constant 3 : i32
    %215 = tpu.memref_slice %arg3[%61, %62, %2] : memref<16x16x128xf32, #tpu.memory_space<any>> -> memref<1x1x128xf32, #tpu.memory_space<any>>
    %216 = tpu.memref_squeeze %215 : memref<1x1x128xf32, #tpu.memory_space<any>> -> memref<1x128xf32, #tpu.memory_space<any>>
    %c3_i32_142 = arith.constant 3 : i32
    %c0_i32_143 = arith.constant 0 : i32
    %217 = tpu.memref_slice %arg4[%c2_i32_140, %c3_i32_142, %c0_i32_143] : memref<4x8x128xf32, #tpu.memory_space<vmem>> -> memref<1x1x128xf32, #tpu.memory_space<vmem>>
    %218 = tpu.memref_squeeze %217 : memref<1x1x128xf32, #tpu.memory_space<vmem>> -> memref<1x128xf32, #tpu.memory_space<vmem>>
    %219 = tpu.memref_slice %arg5[%c3_i32_141] : memref<8x!tpu.dma_semaphore, #tpu.memory_space<semaphore_mem>> -> memref<1x!tpu.dma_semaphore, #tpu.memory_space<semaphore_mem>>
    %220 = tpu.memref_squeeze %219 : memref<1x!tpu.dma_semaphore, #tpu.memory_space<semaphore_mem>> -> memref<!tpu.dma_semaphore, #tpu.memory_space<semaphore_mem>>
    tpu.enqueue_dma source(%216 : memref<1x128xf32, #tpu.memory_space<any>>) target(%218 : memref<1x128xf32, #tpu.memory_space<vmem>>) target_semaphore(%220 : memref<!tpu.dma_semaphore, #tpu.memory_space<semaphore_mem>>)
    %c3_i32_144 = arith.constant 3 : i32
    %c3_i32_145 = arith.constant 3 : i32
    %221 = tpu.memref_slice %arg3[%65, %66, %2] : memref<16x16x128xf32, #tpu.memory_space<any>> -> memref<1x1x128xf32, #tpu.memory_space<any>>
    %222 = tpu.memref_squeeze %221 : memref<1x1x128xf32, #tpu.memory_space<any>> -> memref<1x128xf32, #tpu.memory_space<any>>
    %c3_i32_146 = arith.constant 3 : i32
    %c0_i32_147 = arith.constant 0 : i32
    %223 = tpu.memref_slice %arg4[%c3_i32_144, %c3_i32_146, %c0_i32_147] : memref<4x8x128xf32, #tpu.memory_space<vmem>> -> memref<1x1x128xf32, #tpu.memory_space<vmem>>
    %224 = tpu.memref_squeeze %223 : memref<1x1x128xf32, #tpu.memory_space<vmem>> -> memref<1x128xf32, #tpu.memory_space<vmem>>
    %225 = tpu.memref_slice %arg5[%c3_i32_145] : memref<8x!tpu.dma_semaphore, #tpu.memory_space<semaphore_mem>> -> memref<1x!tpu.dma_semaphore, #tpu.memory_space<semaphore_mem>>
    %226 = tpu.memref_squeeze %225 : memref<1x!tpu.dma_semaphore, #tpu.memory_space<semaphore_mem>> -> memref<!tpu.dma_semaphore, #tpu.memory_space<semaphore_mem>>
    tpu.enqueue_dma source(%222 : memref<1x128xf32, #tpu.memory_space<any>>) target(%224 : memref<1x128xf32, #tpu.memory_space<vmem>>) target_semaphore(%226 : memref<!tpu.dma_semaphore, #tpu.memory_space<semaphore_mem>>)
    %c0_i32_148 = arith.constant 0 : i32
    %c4_i32_149 = arith.constant 4 : i32
    %227 = tpu.memref_slice %arg3[%69, %70, %2] : memref<16x16x128xf32, #tpu.memory_space<any>> -> memref<1x1x128xf32, #tpu.memory_space<any>>
    %228 = tpu.memref_squeeze %227 : memref<1x1x128xf32, #tpu.memory_space<any>> -> memref<1x128xf32, #tpu.memory_space<any>>
    %c4_i32_150 = arith.constant 4 : i32
    %c0_i32_151 = arith.constant 0 : i32
    %229 = tpu.memref_slice %arg4[%c0_i32_148, %c4_i32_150, %c0_i32_151] : memref<4x8x128xf32, #tpu.memory_space<vmem>> -> memref<1x1x128xf32, #tpu.memory_space<vmem>>
    %230 = tpu.memref_squeeze %229 : memref<1x1x128xf32, #tpu.memory_space<vmem>> -> memref<1x128xf32, #tpu.memory_space<vmem>>
    %231 = tpu.memref_slice %arg5[%c4_i32_149] : memref<8x!tpu.dma_semaphore, #tpu.memory_space<semaphore_mem>> -> memref<1x!tpu.dma_semaphore, #tpu.memory_space<semaphore_mem>>
    %232 = tpu.memref_squeeze %231 : memref<1x!tpu.dma_semaphore, #tpu.memory_space<semaphore_mem>> -> memref<!tpu.dma_semaphore, #tpu.memory_space<semaphore_mem>>
    tpu.enqueue_dma source(%228 : memref<1x128xf32, #tpu.memory_space<any>>) target(%230 : memref<1x128xf32, #tpu.memory_space<vmem>>) target_semaphore(%232 : memref<!tpu.dma_semaphore, #tpu.memory_space<semaphore_mem>>)
    %c1_i32_152 = arith.constant 1 : i32
    %c4_i32_153 = arith.constant 4 : i32
    %233 = tpu.memref_slice %arg3[%73, %74, %2] : memref<16x16x128xf32, #tpu.memory_space<any>> -> memref<1x1x128xf32, #tpu.memory_space<any>>
    %234 = tpu.memref_squeeze %233 : memref<1x1x128xf32, #tpu.memory_space<any>> -> memref<1x128xf32, #tpu.memory_space<any>>
    %c4_i32_154 = arith.constant 4 : i32
    %c0_i32_155 = arith.constant 0 : i32
    %235 = tpu.memref_slice %arg4[%c1_i32_152, %c4_i32_154, %c0_i32_155] : memref<4x8x128xf32, #tpu.memory_space<vmem>> -> memref<1x1x128xf32, #tpu.memory_space<vmem>>
    %236 = tpu.memref_squeeze %235 : memref<1x1x128xf32, #tpu.memory_space<vmem>> -> memref<1x128xf32, #tpu.memory_space<vmem>>
    %237 = tpu.memref_slice %arg5[%c4_i32_153] : memref<8x!tpu.dma_semaphore, #tpu.memory_space<semaphore_mem>> -> memref<1x!tpu.dma_semaphore, #tpu.memory_space<semaphore_mem>>
    %238 = tpu.memref_squeeze %237 : memref<1x!tpu.dma_semaphore, #tpu.memory_space<semaphore_mem>> -> memref<!tpu.dma_semaphore, #tpu.memory_space<semaphore_mem>>
    tpu.enqueue_dma source(%234 : memref<1x128xf32, #tpu.memory_space<any>>) target(%236 : memref<1x128xf32, #tpu.memory_space<vmem>>) target_semaphore(%238 : memref<!tpu.dma_semaphore, #tpu.memory_space<semaphore_mem>>)
    %c2_i32_156 = arith.constant 2 : i32
    %c4_i32_157 = arith.constant 4 : i32
    %239 = tpu.memref_slice %arg3[%77, %78, %2] : memref<16x16x128xf32, #tpu.memory_space<any>> -> memref<1x1x128xf32, #tpu.memory_space<any>>
    %240 = tpu.memref_squeeze %239 : memref<1x1x128xf32, #tpu.memory_space<any>> -> memref<1x128xf32, #tpu.memory_space<any>>
    %c4_i32_158 = arith.constant 4 : i32
    %c0_i32_159 = arith.constant 0 : i32
    %241 = tpu.memref_slice %arg4[%c2_i32_156, %c4_i32_158, %c0_i32_159] : memref<4x8x128xf32, #tpu.memory_space<vmem>> -> memref<1x1x128xf32, #tpu.memory_space<vmem>>
    %242 = tpu.memref_squeeze %241 : memref<1x1x128xf32, #tpu.memory_space<vmem>> -> memref<1x128xf32, #tpu.memory_space<vmem>>
    %243 = tpu.memref_slice %arg5[%c4_i32_157] : memref<8x!tpu.dma_semaphore, #tpu.memory_space<semaphore_mem>> -> memref<1x!tpu.dma_semaphore, #tpu.memory_space<semaphore_mem>>
    %244 = tpu.memref_squeeze %243 : memref<1x!tpu.dma_semaphore, #tpu.memory_space<semaphore_mem>> -> memref<!tpu.dma_semaphore, #tpu.memory_space<semaphore_mem>>
    tpu.enqueue_dma source(%240 : memref<1x128xf32, #tpu.memory_space<any>>) target(%242 : memref<1x128xf32, #tpu.memory_space<vmem>>) target_semaphore(%244 : memref<!tpu.dma_semaphore, #tpu.memory_space<semaphore_mem>>)
    %c3_i32_160 = arith.constant 3 : i32
    %c4_i32_161 = arith.constant 4 : i32
    %245 = tpu.memref_slice %arg3[%81, %82, %2] : memref<16x16x128xf32, #tpu.memory_space<any>> -> memref<1x1x128xf32, #tpu.memory_space<any>>
    %246 = tpu.memref_squeeze %245 : memref<1x1x128xf32, #tpu.memory_space<any>> -> memref<1x128xf32, #tpu.memory_space<any>>
    %c4_i32_162 = arith.constant 4 : i32
    %c0_i32_163 = arith.constant 0 : i32
    %247 = tpu.memref_slice %arg4[%c3_i32_160, %c4_i32_162, %c0_i32_163] : memref<4x8x128xf32, #tpu.memory_space<vmem>> -> memref<1x1x128xf32, #tpu.memory_space<vmem>>
    %248 = tpu.memref_squeeze %247 : memref<1x1x128xf32, #tpu.memory_space<vmem>> -> memref<1x128xf32, #tpu.memory_space<vmem>>
    %249 = tpu.memref_slice %arg5[%c4_i32_161] : memref<8x!tpu.dma_semaphore, #tpu.memory_space<semaphore_mem>> -> memref<1x!tpu.dma_semaphore, #tpu.memory_space<semaphore_mem>>
    %250 = tpu.memref_squeeze %249 : memref<1x!tpu.dma_semaphore, #tpu.memory_space<semaphore_mem>> -> memref<!tpu.dma_semaphore, #tpu.memory_space<semaphore_mem>>
    tpu.enqueue_dma source(%246 : memref<1x128xf32, #tpu.memory_space<any>>) target(%248 : memref<1x128xf32, #tpu.memory_space<vmem>>) target_semaphore(%250 : memref<!tpu.dma_semaphore, #tpu.memory_space<semaphore_mem>>)
    %c0_i32_164 = arith.constant 0 : i32
    %c5_i32_165 = arith.constant 5 : i32
    %251 = tpu.memref_slice %arg3[%85, %86, %2] : memref<16x16x128xf32, #tpu.memory_space<any>> -> memref<1x1x128xf32, #tpu.memory_space<any>>
    %252 = tpu.memref_squeeze %251 : memref<1x1x128xf32, #tpu.memory_space<any>> -> memref<1x128xf32, #tpu.memory_space<any>>
    %c5_i32_166 = arith.constant 5 : i32
    %c0_i32_167 = arith.constant 0 : i32
    %253 = tpu.memref_slice %arg4[%c0_i32_164, %c5_i32_166, %c0_i32_167] : memref<4x8x128xf32, #tpu.memory_space<vmem>> -> memref<1x1x128xf32, #tpu.memory_space<vmem>>
    %254 = tpu.memref_squeeze %253 : memref<1x1x128xf32, #tpu.memory_space<vmem>> -> memref<1x128xf32, #tpu.memory_space<vmem>>
    %255 = tpu.memref_slice %arg5[%c5_i32_165] : memref<8x!tpu.dma_semaphore, #tpu.memory_space<semaphore_mem>> -> memref<1x!tpu.dma_semaphore, #tpu.memory_space<semaphore_mem>>
    %256 = tpu.memref_squeeze %255 : memref<1x!tpu.dma_semaphore, #tpu.memory_space<semaphore_mem>> -> memref<!tpu.dma_semaphore, #tpu.memory_space<semaphore_mem>>
    tpu.enqueue_dma source(%252 : memref<1x128xf32, #tpu.memory_space<any>>) target(%254 : memref<1x128xf32, #tpu.memory_space<vmem>>) target_semaphore(%256 : memref<!tpu.dma_semaphore, #tpu.memory_space<semaphore_mem>>)
    %c1_i32_168 = arith.constant 1 : i32
    %c5_i32_169 = arith.constant 5 : i32
    %257 = tpu.memref_slice %arg3[%89, %90, %2] : memref<16x16x128xf32, #tpu.memory_space<any>> -> memref<1x1x128xf32, #tpu.memory_space<any>>
    %258 = tpu.memref_squeeze %257 : memref<1x1x128xf32, #tpu.memory_space<any>> -> memref<1x128xf32, #tpu.memory_space<any>>
    %c5_i32_170 = arith.constant 5 : i32
    %c0_i32_171 = arith.constant 0 : i32
    %259 = tpu.memref_slice %arg4[%c1_i32_168, %c5_i32_170, %c0_i32_171] : memref<4x8x128xf32, #tpu.memory_space<vmem>> -> memref<1x1x128xf32, #tpu.memory_space<vmem>>
    %260 = tpu.memref_squeeze %259 : memref<1x1x128xf32, #tpu.memory_space<vmem>> -> memref<1x128xf32, #tpu.memory_space<vmem>>
    %261 = tpu.memref_slice %arg5[%c5_i32_169] : memref<8x!tpu.dma_semaphore, #tpu.memory_space<semaphore_mem>> -> memref<1x!tpu.dma_semaphore, #tpu.memory_space<semaphore_mem>>
    %262 = tpu.memref_squeeze %261 : memref<1x!tpu.dma_semaphore, #tpu.memory_space<semaphore_mem>> -> memref<!tpu.dma_semaphore, #tpu.memory_space<semaphore_mem>>
    tpu.enqueue_dma source(%258 : memref<1x128xf32, #tpu.memory_space<any>>) target(%260 : memref<1x128xf32, #tpu.memory_space<vmem>>) target_semaphore(%262 : memref<!tpu.dma_semaphore, #tpu.memory_space<semaphore_mem>>)
    %c2_i32_172 = arith.constant 2 : i32
    %c5_i32_173 = arith.constant 5 : i32
    %263 = tpu.memref_slice %arg3[%93, %94, %2] : memref<16x16x128xf32, #tpu.memory_space<any>> -> memref<1x1x128xf32, #tpu.memory_space<any>>
    %264 = tpu.memref_squeeze %263 : memref<1x1x128xf32, #tpu.memory_space<any>> -> memref<1x128xf32, #tpu.memory_space<any>>
    %c5_i32_174 = arith.constant 5 : i32
    %c0_i32_175 = arith.constant 0 : i32
    %265 = tpu.memref_slice %arg4[%c2_i32_172, %c5_i32_174, %c0_i32_175] : memref<4x8x128xf32, #tpu.memory_space<vmem>> -> memref<1x1x128xf32, #tpu.memory_space<vmem>>
    %266 = tpu.memref_squeeze %265 : memref<1x1x128xf32, #tpu.memory_space<vmem>> -> memref<1x128xf32, #tpu.memory_space<vmem>>
    %267 = tpu.memref_slice %arg5[%c5_i32_173] : memref<8x!tpu.dma_semaphore, #tpu.memory_space<semaphore_mem>> -> memref<1x!tpu.dma_semaphore, #tpu.memory_space<semaphore_mem>>
    %268 = tpu.memref_squeeze %267 : memref<1x!tpu.dma_semaphore, #tpu.memory_space<semaphore_mem>> -> memref<!tpu.dma_semaphore, #tpu.memory_space<semaphore_mem>>
    tpu.enqueue_dma source(%264 : memref<1x128xf32, #tpu.memory_space<any>>) target(%266 : memref<1x128xf32, #tpu.memory_space<vmem>>) target_semaphore(%268 : memref<!tpu.dma_semaphore, #tpu.memory_space<semaphore_mem>>)
    %c3_i32_176 = arith.constant 3 : i32
    %c5_i32_177 = arith.constant 5 : i32
    %269 = tpu.memref_slice %arg3[%97, %98, %2] : memref<16x16x128xf32, #tpu.memory_space<any>> -> memref<1x1x128xf32, #tpu.memory_space<any>>
    %270 = tpu.memref_squeeze %269 : memref<1x1x128xf32, #tpu.memory_space<any>> -> memref<1x128xf32, #tpu.memory_space<any>>
    %c5_i32_178 = arith.constant 5 : i32
    %c0_i32_179 = arith.constant 0 : i32
    %271 = tpu.memref_slice %arg4[%c3_i32_176, %c5_i32_178, %c0_i32_179] : memref<4x8x128xf32, #tpu.memory_space<vmem>> -> memref<1x1x128xf32, #tpu.memory_space<vmem>>
    %272 = tpu.memref_squeeze %271 : memref<1x1x128xf32, #tpu.memory_space<vmem>> -> memref<1x128xf32, #tpu.memory_space<vmem>>
    %273 = tpu.memref_slice %arg5[%c5_i32_177] : memref<8x!tpu.dma_semaphore, #tpu.memory_space<semaphore_mem>> -> memref<1x!tpu.dma_semaphore, #tpu.memory_space<semaphore_mem>>
    %274 = tpu.memref_squeeze %273 : memref<1x!tpu.dma_semaphore, #tpu.memory_space<semaphore_mem>> -> memref<!tpu.dma_semaphore, #tpu.memory_space<semaphore_mem>>
    tpu.enqueue_dma source(%270 : memref<1x128xf32, #tpu.memory_space<any>>) target(%272 : memref<1x128xf32, #tpu.memory_space<vmem>>) target_semaphore(%274 : memref<!tpu.dma_semaphore, #tpu.memory_space<semaphore_mem>>)
    %c0_i32_180 = arith.constant 0 : i32
    %c6_i32_181 = arith.constant 6 : i32
    %275 = tpu.memref_slice %arg3[%101, %102, %2] : memref<16x16x128xf32, #tpu.memory_space<any>> -> memref<1x1x128xf32, #tpu.memory_space<any>>
    %276 = tpu.memref_squeeze %275 : memref<1x1x128xf32, #tpu.memory_space<any>> -> memref<1x128xf32, #tpu.memory_space<any>>
    %c6_i32_182 = arith.constant 6 : i32
    %c0_i32_183 = arith.constant 0 : i32
    %277 = tpu.memref_slice %arg4[%c0_i32_180, %c6_i32_182, %c0_i32_183] : memref<4x8x128xf32, #tpu.memory_space<vmem>> -> memref<1x1x128xf32, #tpu.memory_space<vmem>>
    %278 = tpu.memref_squeeze %277 : memref<1x1x128xf32, #tpu.memory_space<vmem>> -> memref<1x128xf32, #tpu.memory_space<vmem>>
    %279 = tpu.memref_slice %arg5[%c6_i32_181] : memref<8x!tpu.dma_semaphore, #tpu.memory_space<semaphore_mem>> -> memref<1x!tpu.dma_semaphore, #tpu.memory_space<semaphore_mem>>
    %280 = tpu.memref_squeeze %279 : memref<1x!tpu.dma_semaphore, #tpu.memory_space<semaphore_mem>> -> memref<!tpu.dma_semaphore, #tpu.memory_space<semaphore_mem>>
    tpu.enqueue_dma source(%276 : memref<1x128xf32, #tpu.memory_space<any>>) target(%278 : memref<1x128xf32, #tpu.memory_space<vmem>>) target_semaphore(%280 : memref<!tpu.dma_semaphore, #tpu.memory_space<semaphore_mem>>)
    %c1_i32_184 = arith.constant 1 : i32
    %c6_i32_185 = arith.constant 6 : i32
    %281 = tpu.memref_slice %arg3[%105, %106, %2] : memref<16x16x128xf32, #tpu.memory_space<any>> -> memref<1x1x128xf32, #tpu.memory_space<any>>
    %282 = tpu.memref_squeeze %281 : memref<1x1x128xf32, #tpu.memory_space<any>> -> memref<1x128xf32, #tpu.memory_space<any>>
    %c6_i32_186 = arith.constant 6 : i32
    %c0_i32_187 = arith.constant 0 : i32
    %283 = tpu.memref_slice %arg4[%c1_i32_184, %c6_i32_186, %c0_i32_187] : memref<4x8x128xf32, #tpu.memory_space<vmem>> -> memref<1x1x128xf32, #tpu.memory_space<vmem>>
    %284 = tpu.memref_squeeze %283 : memref<1x1x128xf32, #tpu.memory_space<vmem>> -> memref<1x128xf32, #tpu.memory_space<vmem>>
    %285 = tpu.memref_slice %arg5[%c6_i32_185] : memref<8x!tpu.dma_semaphore, #tpu.memory_space<semaphore_mem>> -> memref<1x!tpu.dma_semaphore, #tpu.memory_space<semaphore_mem>>
    %286 = tpu.memref_squeeze %285 : memref<1x!tpu.dma_semaphore, #tpu.memory_space<semaphore_mem>> -> memref<!tpu.dma_semaphore, #tpu.memory_space<semaphore_mem>>
    tpu.enqueue_dma source(%282 : memref<1x128xf32, #tpu.memory_space<any>>) target(%284 : memref<1x128xf32, #tpu.memory_space<vmem>>) target_semaphore(%286 : memref<!tpu.dma_semaphore, #tpu.memory_space<semaphore_mem>>)
    %c2_i32_188 = arith.constant 2 : i32
    %c6_i32_189 = arith.constant 6 : i32
    %287 = tpu.memref_slice %arg3[%109, %110, %2] : memref<16x16x128xf32, #tpu.memory_space<any>> -> memref<1x1x128xf32, #tpu.memory_space<any>>
    %288 = tpu.memref_squeeze %287 : memref<1x1x128xf32, #tpu.memory_space<any>> -> memref<1x128xf32, #tpu.memory_space<any>>
    %c6_i32_190 = arith.constant 6 : i32
    %c0_i32_191 = arith.constant 0 : i32
    %289 = tpu.memref_slice %arg4[%c2_i32_188, %c6_i32_190, %c0_i32_191] : memref<4x8x128xf32, #tpu.memory_space<vmem>> -> memref<1x1x128xf32, #tpu.memory_space<vmem>>
    %290 = tpu.memref_squeeze %289 : memref<1x1x128xf32, #tpu.memory_space<vmem>> -> memref<1x128xf32, #tpu.memory_space<vmem>>
    %291 = tpu.memref_slice %arg5[%c6_i32_189] : memref<8x!tpu.dma_semaphore, #tpu.memory_space<semaphore_mem>> -> memref<1x!tpu.dma_semaphore, #tpu.memory_space<semaphore_mem>>
    %292 = tpu.memref_squeeze %291 : memref<1x!tpu.dma_semaphore, #tpu.memory_space<semaphore_mem>> -> memref<!tpu.dma_semaphore, #tpu.memory_space<semaphore_mem>>
    tpu.enqueue_dma source(%288 : memref<1x128xf32, #tpu.memory_space<any>>) target(%290 : memref<1x128xf32, #tpu.memory_space<vmem>>) target_semaphore(%292 : memref<!tpu.dma_semaphore, #tpu.memory_space<semaphore_mem>>)
    %c3_i32_192 = arith.constant 3 : i32
    %c6_i32_193 = arith.constant 6 : i32
    %293 = tpu.memref_slice %arg3[%113, %114, %2] : memref<16x16x128xf32, #tpu.memory_space<any>> -> memref<1x1x128xf32, #tpu.memory_space<any>>
    %294 = tpu.memref_squeeze %293 : memref<1x1x128xf32, #tpu.memory_space<any>> -> memref<1x128xf32, #tpu.memory_space<any>>
    %c6_i32_194 = arith.constant 6 : i32
    %c0_i32_195 = arith.constant 0 : i32
    %295 = tpu.memref_slice %arg4[%c3_i32_192, %c6_i32_194, %c0_i32_195] : memref<4x8x128xf32, #tpu.memory_space<vmem>> -> memref<1x1x128xf32, #tpu.memory_space<vmem>>
    %296 = tpu.memref_squeeze %295 : memref<1x1x128xf32, #tpu.memory_space<vmem>> -> memref<1x128xf32, #tpu.memory_space<vmem>>
    %297 = tpu.memref_slice %arg5[%c6_i32_193] : memref<8x!tpu.dma_semaphore, #tpu.memory_space<semaphore_mem>> -> memref<1x!tpu.dma_semaphore, #tpu.memory_space<semaphore_mem>>
    %298 = tpu.memref_squeeze %297 : memref<1x!tpu.dma_semaphore, #tpu.memory_space<semaphore_mem>> -> memref<!tpu.dma_semaphore, #tpu.memory_space<semaphore_mem>>
    tpu.enqueue_dma source(%294 : memref<1x128xf32, #tpu.memory_space<any>>) target(%296 : memref<1x128xf32, #tpu.memory_space<vmem>>) target_semaphore(%298 : memref<!tpu.dma_semaphore, #tpu.memory_space<semaphore_mem>>)
    %c0_i32_196 = arith.constant 0 : i32
    %c7_i32_197 = arith.constant 7 : i32
    %299 = tpu.memref_slice %arg3[%117, %118, %2] : memref<16x16x128xf32, #tpu.memory_space<any>> -> memref<1x1x128xf32, #tpu.memory_space<any>>
    %300 = tpu.memref_squeeze %299 : memref<1x1x128xf32, #tpu.memory_space<any>> -> memref<1x128xf32, #tpu.memory_space<any>>
    %c7_i32_198 = arith.constant 7 : i32
    %c0_i32_199 = arith.constant 0 : i32
    %301 = tpu.memref_slice %arg4[%c0_i32_196, %c7_i32_198, %c0_i32_199] : memref<4x8x128xf32, #tpu.memory_space<vmem>> -> memref<1x1x128xf32, #tpu.memory_space<vmem>>
    %302 = tpu.memref_squeeze %301 : memref<1x1x128xf32, #tpu.memory_space<vmem>> -> memref<1x128xf32, #tpu.memory_space<vmem>>
    %303 = tpu.memref_slice %arg5[%c7_i32_197] : memref<8x!tpu.dma_semaphore, #tpu.memory_space<semaphore_mem>> -> memref<1x!tpu.dma_semaphore, #tpu.memory_space<semaphore_mem>>
    %304 = tpu.memref_squeeze %303 : memref<1x!tpu.dma_semaphore, #tpu.memory_space<semaphore_mem>> -> memref<!tpu.dma_semaphore, #tpu.memory_space<semaphore_mem>>
    tpu.enqueue_dma source(%300 : memref<1x128xf32, #tpu.memory_space<any>>) target(%302 : memref<1x128xf32, #tpu.memory_space<vmem>>) target_semaphore(%304 : memref<!tpu.dma_semaphore, #tpu.memory_space<semaphore_mem>>)
    %c1_i32_200 = arith.constant 1 : i32
    %c7_i32_201 = arith.constant 7 : i32
    %305 = tpu.memref_slice %arg3[%121, %122, %2] : memref<16x16x128xf32, #tpu.memory_space<any>> -> memref<1x1x128xf32, #tpu.memory_space<any>>
    %306 = tpu.memref_squeeze %305 : memref<1x1x128xf32, #tpu.memory_space<any>> -> memref<1x128xf32, #tpu.memory_space<any>>
    %c7_i32_202 = arith.constant 7 : i32
    %c0_i32_203 = arith.constant 0 : i32
    %307 = tpu.memref_slice %arg4[%c1_i32_200, %c7_i32_202, %c0_i32_203] : memref<4x8x128xf32, #tpu.memory_space<vmem>> -> memref<1x1x128xf32, #tpu.memory_space<vmem>>
    %308 = tpu.memref_squeeze %307 : memref<1x1x128xf32, #tpu.memory_space<vmem>> -> memref<1x128xf32, #tpu.memory_space<vmem>>
    %309 = tpu.memref_slice %arg5[%c7_i32_201] : memref<8x!tpu.dma_semaphore, #tpu.memory_space<semaphore_mem>> -> memref<1x!tpu.dma_semaphore, #tpu.memory_space<semaphore_mem>>
    %310 = tpu.memref_squeeze %309 : memref<1x!tpu.dma_semaphore, #tpu.memory_space<semaphore_mem>> -> memref<!tpu.dma_semaphore, #tpu.memory_space<semaphore_mem>>
    tpu.enqueue_dma source(%306 : memref<1x128xf32, #tpu.memory_space<any>>) target(%308 : memref<1x128xf32, #tpu.memory_space<vmem>>) target_semaphore(%310 : memref<!tpu.dma_semaphore, #tpu.memory_space<semaphore_mem>>)
    %c2_i32_204 = arith.constant 2 : i32
    %c7_i32_205 = arith.constant 7 : i32
    %311 = tpu.memref_slice %arg3[%125, %126, %2] : memref<16x16x128xf32, #tpu.memory_space<any>> -> memref<1x1x128xf32, #tpu.memory_space<any>>
    %312 = tpu.memref_squeeze %311 : memref<1x1x128xf32, #tpu.memory_space<any>> -> memref<1x128xf32, #tpu.memory_space<any>>
    %c7_i32_206 = arith.constant 7 : i32
    %c0_i32_207 = arith.constant 0 : i32
    %313 = tpu.memref_slice %arg4[%c2_i32_204, %c7_i32_206, %c0_i32_207] : memref<4x8x128xf32, #tpu.memory_space<vmem>> -> memref<1x1x128xf32, #tpu.memory_space<vmem>>
    %314 = tpu.memref_squeeze %313 : memref<1x1x128xf32, #tpu.memory_space<vmem>> -> memref<1x128xf32, #tpu.memory_space<vmem>>
    %315 = tpu.memref_slice %arg5[%c7_i32_205] : memref<8x!tpu.dma_semaphore, #tpu.memory_space<semaphore_mem>> -> memref<1x!tpu.dma_semaphore, #tpu.memory_space<semaphore_mem>>
    %316 = tpu.memref_squeeze %315 : memref<1x!tpu.dma_semaphore, #tpu.memory_space<semaphore_mem>> -> memref<!tpu.dma_semaphore, #tpu.memory_space<semaphore_mem>>
    tpu.enqueue_dma source(%312 : memref<1x128xf32, #tpu.memory_space<any>>) target(%314 : memref<1x128xf32, #tpu.memory_space<vmem>>) target_semaphore(%316 : memref<!tpu.dma_semaphore, #tpu.memory_space<semaphore_mem>>)
    %c3_i32_208 = arith.constant 3 : i32
    %c7_i32_209 = arith.constant 7 : i32
    %317 = tpu.memref_slice %arg3[%129, %130, %2] : memref<16x16x128xf32, #tpu.memory_space<any>> -> memref<1x1x128xf32, #tpu.memory_space<any>>
    %318 = tpu.memref_squeeze %317 : memref<1x1x128xf32, #tpu.memory_space<any>> -> memref<1x128xf32, #tpu.memory_space<any>>
    %c7_i32_210 = arith.constant 7 : i32
    %c0_i32_211 = arith.constant 0 : i32
    %319 = tpu.memref_slice %arg4[%c3_i32_208, %c7_i32_210, %c0_i32_211] : memref<4x8x128xf32, #tpu.memory_space<vmem>> -> memref<1x1x128xf32, #tpu.memory_space<vmem>>
    %320 = tpu.memref_squeeze %319 : memref<1x1x128xf32, #tpu.memory_space<vmem>> -> memref<1x128xf32, #tpu.memory_space<vmem>>
    %321 = tpu.memref_slice %arg5[%c7_i32_209] : memref<8x!tpu.dma_semaphore, #tpu.memory_space<semaphore_mem>> -> memref<1x!tpu.dma_semaphore, #tpu.memory_space<semaphore_mem>>
    %322 = tpu.memref_squeeze %321 : memref<1x!tpu.dma_semaphore, #tpu.memory_space<semaphore_mem>> -> memref<!tpu.dma_semaphore, #tpu.memory_space<semaphore_mem>>
    tpu.enqueue_dma source(%318 : memref<1x128xf32, #tpu.memory_space<any>>) target(%320 : memref<1x128xf32, #tpu.memory_space<vmem>>) target_semaphore(%322 : memref<!tpu.dma_semaphore, #tpu.memory_space<semaphore_mem>>)
    %c0_i32_212 = arith.constant 0 : i32
    %c0_i32_213 = arith.constant 0 : i32
    %323 = tpu.memref_slice %arg3[%5, %6, %2] : memref<16x16x128xf32, #tpu.memory_space<any>> -> memref<1x1x128xf32, #tpu.memory_space<any>>
    %324 = tpu.memref_squeeze %323 : memref<1x1x128xf32, #tpu.memory_space<any>> -> memref<1x128xf32, #tpu.memory_space<any>>
    %c0_i32_214 = arith.constant 0 : i32
    %c0_i32_215 = arith.constant 0 : i32
    %325 = tpu.memref_slice %arg4[%c0_i32_212, %c0_i32_214, %c0_i32_215] : memref<4x8x128xf32, #tpu.memory_space<vmem>> -> memref<1x1x128xf32, #tpu.memory_space<vmem>>
    %326 = tpu.memref_squeeze %325 : memref<1x1x128xf32, #tpu.memory_space<vmem>> -> memref<1x128xf32, #tpu.memory_space<vmem>>
    %327 = tpu.memref_slice %arg5[%c0_i32_213] : memref<8x!tpu.dma_semaphore, #tpu.memory_space<semaphore_mem>> -> memref<1x!tpu.dma_semaphore, #tpu.memory_space<semaphore_mem>>
    %328 = tpu.memref_squeeze %327 : memref<1x!tpu.dma_semaphore, #tpu.memory_space<semaphore_mem>> -> memref<!tpu.dma_semaphore, #tpu.memory_space<semaphore_mem>>
    tpu.wait_dma2 semaphore(%328 : memref<!tpu.dma_semaphore, #tpu.memory_space<semaphore_mem>>) src(%324 : memref<1x128xf32, #tpu.memory_space<any>>) dst(%326 : memref<1x128xf32, #tpu.memory_space<vmem>>)
    %c1_i32_216 = arith.constant 1 : i32
    %c0_i32_217 = arith.constant 0 : i32
    %329 = tpu.memref_slice %arg3[%9, %10, %2] : memref<16x16x128xf32, #tpu.memory_space<any>> -> memref<1x1x128xf32, #tpu.memory_space<any>>
    %330 = tpu.memref_squeeze %329 : memref<1x1x128xf32, #tpu.memory_space<any>> -> memref<1x128xf32, #tpu.memory_space<any>>
    %c0_i32_218 = arith.constant 0 : i32
    %c0_i32_219 = arith.constant 0 : i32
    %331 = tpu.memref_slice %arg4[%c1_i32_216, %c0_i32_218, %c0_i32_219] : memref<4x8x128xf32, #tpu.memory_space<vmem>> -> memref<1x1x128xf32, #tpu.memory_space<vmem>>
    %332 = tpu.memref_squeeze %331 : memref<1x1x128xf32, #tpu.memory_space<vmem>> -> memref<1x128xf32, #tpu.memory_space<vmem>>
    %333 = tpu.memref_slice %arg5[%c0_i32_217] : memref<8x!tpu.dma_semaphore, #tpu.memory_space<semaphore_mem>> -> memref<1x!tpu.dma_semaphore, #tpu.memory_space<semaphore_mem>>
    %334 = tpu.memref_squeeze %333 : memref<1x!tpu.dma_semaphore, #tpu.memory_space<semaphore_mem>> -> memref<!tpu.dma_semaphore, #tpu.memory_space<semaphore_mem>>
    tpu.wait_dma2 semaphore(%334 : memref<!tpu.dma_semaphore, #tpu.memory_space<semaphore_mem>>) src(%330 : memref<1x128xf32, #tpu.memory_space<any>>) dst(%332 : memref<1x128xf32, #tpu.memory_space<vmem>>)
    %c2_i32_220 = arith.constant 2 : i32
    %c0_i32_221 = arith.constant 0 : i32
    %335 = tpu.memref_slice %arg3[%13, %14, %2] : memref<16x16x128xf32, #tpu.memory_space<any>> -> memref<1x1x128xf32, #tpu.memory_space<any>>
    %336 = tpu.memref_squeeze %335 : memref<1x1x128xf32, #tpu.memory_space<any>> -> memref<1x128xf32, #tpu.memory_space<any>>
    %c0_i32_222 = arith.constant 0 : i32
    %c0_i32_223 = arith.constant 0 : i32
    %337 = tpu.memref_slice %arg4[%c2_i32_220, %c0_i32_222, %c0_i32_223] : memref<4x8x128xf32, #tpu.memory_space<vmem>> -> memref<1x1x128xf32, #tpu.memory_space<vmem>>
    %338 = tpu.memref_squeeze %337 : memref<1x1x128xf32, #tpu.memory_space<vmem>> -> memref<1x128xf32, #tpu.memory_space<vmem>>
    %339 = tpu.memref_slice %arg5[%c0_i32_221] : memref<8x!tpu.dma_semaphore, #tpu.memory_space<semaphore_mem>> -> memref<1x!tpu.dma_semaphore, #tpu.memory_space<semaphore_mem>>
    %340 = tpu.memref_squeeze %339 : memref<1x!tpu.dma_semaphore, #tpu.memory_space<semaphore_mem>> -> memref<!tpu.dma_semaphore, #tpu.memory_space<semaphore_mem>>
    tpu.wait_dma2 semaphore(%340 : memref<!tpu.dma_semaphore, #tpu.memory_space<semaphore_mem>>) src(%336 : memref<1x128xf32, #tpu.memory_space<any>>) dst(%338 : memref<1x128xf32, #tpu.memory_space<vmem>>)
    %c3_i32_224 = arith.constant 3 : i32
    %c0_i32_225 = arith.constant 0 : i32
    %341 = tpu.memref_slice %arg3[%17, %18, %2] : memref<16x16x128xf32, #tpu.memory_space<any>> -> memref<1x1x128xf32, #tpu.memory_space<any>>
    %342 = tpu.memref_squeeze %341 : memref<1x1x128xf32, #tpu.memory_space<any>> -> memref<1x128xf32, #tpu.memory_space<any>>
    %c0_i32_226 = arith.constant 0 : i32
    %c0_i32_227 = arith.constant 0 : i32
    %343 = tpu.memref_slice %arg4[%c3_i32_224, %c0_i32_226, %c0_i32_227] : memref<4x8x128xf32, #tpu.memory_space<vmem>> -> memref<1x1x128xf32, #tpu.memory_space<vmem>>
    %344 = tpu.memref_squeeze %343 : memref<1x1x128xf32, #tpu.memory_space<vmem>> -> memref<1x128xf32, #tpu.memory_space<vmem>>
    %345 = tpu.memref_slice %arg5[%c0_i32_225] : memref<8x!tpu.dma_semaphore, #tpu.memory_space<semaphore_mem>> -> memref<1x!tpu.dma_semaphore, #tpu.memory_space<semaphore_mem>>
    %346 = tpu.memref_squeeze %345 : memref<1x!tpu.dma_semaphore, #tpu.memory_space<semaphore_mem>> -> memref<!tpu.dma_semaphore, #tpu.memory_space<semaphore_mem>>
    tpu.wait_dma2 semaphore(%346 : memref<!tpu.dma_semaphore, #tpu.memory_space<semaphore_mem>>) src(%342 : memref<1x128xf32, #tpu.memory_space<any>>) dst(%344 : memref<1x128xf32, #tpu.memory_space<vmem>>)
    %c0_i32_228 = arith.constant 0 : i32
    %c1_i32_229 = arith.constant 1 : i32
    %347 = tpu.memref_slice %arg3[%21, %22, %2] : memref<16x16x128xf32, #tpu.memory_space<any>> -> memref<1x1x128xf32, #tpu.memory_space<any>>
    %348 = tpu.memref_squeeze %347 : memref<1x1x128xf32, #tpu.memory_space<any>> -> memref<1x128xf32, #tpu.memory_space<any>>
    %c1_i32_230 = arith.constant 1 : i32
    %c0_i32_231 = arith.constant 0 : i32
    %349 = tpu.memref_slice %arg4[%c0_i32_228, %c1_i32_230, %c0_i32_231] : memref<4x8x128xf32, #tpu.memory_space<vmem>> -> memref<1x1x128xf32, #tpu.memory_space<vmem>>
    %350 = tpu.memref_squeeze %349 : memref<1x1x128xf32, #tpu.memory_space<vmem>> -> memref<1x128xf32, #tpu.memory_space<vmem>>
    %351 = tpu.memref_slice %arg5[%c1_i32_229] : memref<8x!tpu.dma_semaphore, #tpu.memory_space<semaphore_mem>> -> memref<1x!tpu.dma_semaphore, #tpu.memory_space<semaphore_mem>>
    %352 = tpu.memref_squeeze %351 : memref<1x!tpu.dma_semaphore, #tpu.memory_space<semaphore_mem>> -> memref<!tpu.dma_semaphore, #tpu.memory_space<semaphore_mem>>
    tpu.wait_dma2 semaphore(%352 : memref<!tpu.dma_semaphore, #tpu.memory_space<semaphore_mem>>) src(%348 : memref<1x128xf32, #tpu.memory_space<any>>) dst(%350 : memref<1x128xf32, #tpu.memory_space<vmem>>)
    %c1_i32_232 = arith.constant 1 : i32
    %c1_i32_233 = arith.constant 1 : i32
    %353 = tpu.memref_slice %arg3[%25, %26, %2] : memref<16x16x128xf32, #tpu.memory_space<any>> -> memref<1x1x128xf32, #tpu.memory_space<any>>
    %354 = tpu.memref_squeeze %353 : memref<1x1x128xf32, #tpu.memory_space<any>> -> memref<1x128xf32, #tpu.memory_space<any>>
    %c1_i32_234 = arith.constant 1 : i32
    %c0_i32_235 = arith.constant 0 : i32
    %355 = tpu.memref_slice %arg4[%c1_i32_232, %c1_i32_234, %c0_i32_235] : memref<4x8x128xf32, #tpu.memory_space<vmem>> -> memref<1x1x128xf32, #tpu.memory_space<vmem>>
    %356 = tpu.memref_squeeze %355 : memref<1x1x128xf32, #tpu.memory_space<vmem>> -> memref<1x128xf32, #tpu.memory_space<vmem>>
    %357 = tpu.memref_slice %arg5[%c1_i32_233] : memref<8x!tpu.dma_semaphore, #tpu.memory_space<semaphore_mem>> -> memref<1x!tpu.dma_semaphore, #tpu.memory_space<semaphore_mem>>
    %358 = tpu.memref_squeeze %357 : memref<1x!tpu.dma_semaphore, #tpu.memory_space<semaphore_mem>> -> memref<!tpu.dma_semaphore, #tpu.memory_space<semaphore_mem>>
    tpu.wait_dma2 semaphore(%358 : memref<!tpu.dma_semaphore, #tpu.memory_space<semaphore_mem>>) src(%354 : memref<1x128xf32, #tpu.memory_space<any>>) dst(%356 : memref<1x128xf32, #tpu.memory_space<vmem>>)
    %c2_i32_236 = arith.constant 2 : i32
    %c1_i32_237 = arith.constant 1 : i32
    %359 = tpu.memref_slice %arg3[%29, %30, %2] : memref<16x16x128xf32, #tpu.memory_space<any>> -> memref<1x1x128xf32, #tpu.memory_space<any>>
    %360 = tpu.memref_squeeze %359 : memref<1x1x128xf32, #tpu.memory_space<any>> -> memref<1x128xf32, #tpu.memory_space<any>>
    %c1_i32_238 = arith.constant 1 : i32
    %c0_i32_239 = arith.constant 0 : i32
    %361 = tpu.memref_slice %arg4[%c2_i32_236, %c1_i32_238, %c0_i32_239] : memref<4x8x128xf32, #tpu.memory_space<vmem>> -> memref<1x1x128xf32, #tpu.memory_space<vmem>>
    %362 = tpu.memref_squeeze %361 : memref<1x1x128xf32, #tpu.memory_space<vmem>> -> memref<1x128xf32, #tpu.memory_space<vmem>>
    %363 = tpu.memref_slice %arg5[%c1_i32_237] : memref<8x!tpu.dma_semaphore, #tpu.memory_space<semaphore_mem>> -> memref<1x!tpu.dma_semaphore, #tpu.memory_space<semaphore_mem>>
    %364 = tpu.memref_squeeze %363 : memref<1x!tpu.dma_semaphore, #tpu.memory_space<semaphore_mem>> -> memref<!tpu.dma_semaphore, #tpu.memory_space<semaphore_mem>>
    tpu.wait_dma2 semaphore(%364 : memref<!tpu.dma_semaphore, #tpu.memory_space<semaphore_mem>>) src(%360 : memref<1x128xf32, #tpu.memory_space<any>>) dst(%362 : memref<1x128xf32, #tpu.memory_space<vmem>>)
    %c3_i32_240 = arith.constant 3 : i32
    %c1_i32_241 = arith.constant 1 : i32
    %365 = tpu.memref_slice %arg3[%33, %34, %2] : memref<16x16x128xf32, #tpu.memory_space<any>> -> memref<1x1x128xf32, #tpu.memory_space<any>>
    %366 = tpu.memref_squeeze %365 : memref<1x1x128xf32, #tpu.memory_space<any>> -> memref<1x128xf32, #tpu.memory_space<any>>
    %c1_i32_242 = arith.constant 1 : i32
    %c0_i32_243 = arith.constant 0 : i32
    %367 = tpu.memref_slice %arg4[%c3_i32_240, %c1_i32_242, %c0_i32_243] : memref<4x8x128xf32, #tpu.memory_space<vmem>> -> memref<1x1x128xf32, #tpu.memory_space<vmem>>
    %368 = tpu.memref_squeeze %367 : memref<1x1x128xf32, #tpu.memory_space<vmem>> -> memref<1x128xf32, #tpu.memory_space<vmem>>
    %369 = tpu.memref_slice %arg5[%c1_i32_241] : memref<8x!tpu.dma_semaphore, #tpu.memory_space<semaphore_mem>> -> memref<1x!tpu.dma_semaphore, #tpu.memory_space<semaphore_mem>>
    %370 = tpu.memref_squeeze %369 : memref<1x!tpu.dma_semaphore, #tpu.memory_space<semaphore_mem>> -> memref<!tpu.dma_semaphore, #tpu.memory_space<semaphore_mem>>
    tpu.wait_dma2 semaphore(%370 : memref<!tpu.dma_semaphore, #tpu.memory_space<semaphore_mem>>) src(%366 : memref<1x128xf32, #tpu.memory_space<any>>) dst(%368 : memref<1x128xf32, #tpu.memory_space<vmem>>)
    %c0_i32_244 = arith.constant 0 : i32
    %c2_i32_245 = arith.constant 2 : i32
    %371 = tpu.memref_slice %arg3[%37, %38, %2] : memref<16x16x128xf32, #tpu.memory_space<any>> -> memref<1x1x128xf32, #tpu.memory_space<any>>
    %372 = tpu.memref_squeeze %371 : memref<1x1x128xf32, #tpu.memory_space<any>> -> memref<1x128xf32, #tpu.memory_space<any>>
    %c2_i32_246 = arith.constant 2 : i32
    %c0_i32_247 = arith.constant 0 : i32
    %373 = tpu.memref_slice %arg4[%c0_i32_244, %c2_i32_246, %c0_i32_247] : memref<4x8x128xf32, #tpu.memory_space<vmem>> -> memref<1x1x128xf32, #tpu.memory_space<vmem>>
    %374 = tpu.memref_squeeze %373 : memref<1x1x128xf32, #tpu.memory_space<vmem>> -> memref<1x128xf32, #tpu.memory_space<vmem>>
    %375 = tpu.memref_slice %arg5[%c2_i32_245] : memref<8x!tpu.dma_semaphore, #tpu.memory_space<semaphore_mem>> -> memref<1x!tpu.dma_semaphore, #tpu.memory_space<semaphore_mem>>
    %376 = tpu.memref_squeeze %375 : memref<1x!tpu.dma_semaphore, #tpu.memory_space<semaphore_mem>> -> memref<!tpu.dma_semaphore, #tpu.memory_space<semaphore_mem>>
    tpu.wait_dma2 semaphore(%376 : memref<!tpu.dma_semaphore, #tpu.memory_space<semaphore_mem>>) src(%372 : memref<1x128xf32, #tpu.memory_space<any>>) dst(%374 : memref<1x128xf32, #tpu.memory_space<vmem>>)
    %c1_i32_248 = arith.constant 1 : i32
    %c2_i32_249 = arith.constant 2 : i32
    %377 = tpu.memref_slice %arg3[%41, %42, %2] : memref<16x16x128xf32, #tpu.memory_space<any>> -> memref<1x1x128xf32, #tpu.memory_space<any>>
    %378 = tpu.memref_squeeze %377 : memref<1x1x128xf32, #tpu.memory_space<any>> -> memref<1x128xf32, #tpu.memory_space<any>>
    %c2_i32_250 = arith.constant 2 : i32
    %c0_i32_251 = arith.constant 0 : i32
    %379 = tpu.memref_slice %arg4[%c1_i32_248, %c2_i32_250, %c0_i32_251] : memref<4x8x128xf32, #tpu.memory_space<vmem>> -> memref<1x1x128xf32, #tpu.memory_space<vmem>>
    %380 = tpu.memref_squeeze %379 : memref<1x1x128xf32, #tpu.memory_space<vmem>> -> memref<1x128xf32, #tpu.memory_space<vmem>>
    %381 = tpu.memref_slice %arg5[%c2_i32_249] : memref<8x!tpu.dma_semaphore, #tpu.memory_space<semaphore_mem>> -> memref<1x!tpu.dma_semaphore, #tpu.memory_space<semaphore_mem>>
    %382 = tpu.memref_squeeze %381 : memref<1x!tpu.dma_semaphore, #tpu.memory_space<semaphore_mem>> -> memref<!tpu.dma_semaphore, #tpu.memory_space<semaphore_mem>>
    tpu.wait_dma2 semaphore(%382 : memref<!tpu.dma_semaphore, #tpu.memory_space<semaphore_mem>>) src(%378 : memref<1x128xf32, #tpu.memory_space<any>>) dst(%380 : memref<1x128xf32, #tpu.memory_space<vmem>>)
    %c2_i32_252 = arith.constant 2 : i32
    %c2_i32_253 = arith.constant 2 : i32
    %383 = tpu.memref_slice %arg3[%45, %46, %2] : memref<16x16x128xf32, #tpu.memory_space<any>> -> memref<1x1x128xf32, #tpu.memory_space<any>>
    %384 = tpu.memref_squeeze %383 : memref<1x1x128xf32, #tpu.memory_space<any>> -> memref<1x128xf32, #tpu.memory_space<any>>
    %c2_i32_254 = arith.constant 2 : i32
    %c0_i32_255 = arith.constant 0 : i32
    %385 = tpu.memref_slice %arg4[%c2_i32_252, %c2_i32_254, %c0_i32_255] : memref<4x8x128xf32, #tpu.memory_space<vmem>> -> memref<1x1x128xf32, #tpu.memory_space<vmem>>
    %386 = tpu.memref_squeeze %385 : memref<1x1x128xf32, #tpu.memory_space<vmem>> -> memref<1x128xf32, #tpu.memory_space<vmem>>
    %387 = tpu.memref_slice %arg5[%c2_i32_253] : memref<8x!tpu.dma_semaphore, #tpu.memory_space<semaphore_mem>> -> memref<1x!tpu.dma_semaphore, #tpu.memory_space<semaphore_mem>>
    %388 = tpu.memref_squeeze %387 : memref<1x!tpu.dma_semaphore, #tpu.memory_space<semaphore_mem>> -> memref<!tpu.dma_semaphore, #tpu.memory_space<semaphore_mem>>
    tpu.wait_dma2 semaphore(%388 : memref<!tpu.dma_semaphore, #tpu.memory_space<semaphore_mem>>) src(%384 : memref<1x128xf32, #tpu.memory_space<any>>) dst(%386 : memref<1x128xf32, #tpu.memory_space<vmem>>)
    %c3_i32_256 = arith.constant 3 : i32
    %c2_i32_257 = arith.constant 2 : i32
    %389 = tpu.memref_slice %arg3[%49, %50, %2] : memref<16x16x128xf32, #tpu.memory_space<any>> -> memref<1x1x128xf32, #tpu.memory_space<any>>
    %390 = tpu.memref_squeeze %389 : memref<1x1x128xf32, #tpu.memory_space<any>> -> memref<1x128xf32, #tpu.memory_space<any>>
    %c2_i32_258 = arith.constant 2 : i32
    %c0_i32_259 = arith.constant 0 : i32
    %391 = tpu.memref_slice %arg4[%c3_i32_256, %c2_i32_258, %c0_i32_259] : memref<4x8x128xf32, #tpu.memory_space<vmem>> -> memref<1x1x128xf32, #tpu.memory_space<vmem>>
    %392 = tpu.memref_squeeze %391 : memref<1x1x128xf32, #tpu.memory_space<vmem>> -> memref<1x128xf32, #tpu.memory_space<vmem>>
    %393 = tpu.memref_slice %arg5[%c2_i32_257] : memref<8x!tpu.dma_semaphore, #tpu.memory_space<semaphore_mem>> -> memref<1x!tpu.dma_semaphore, #tpu.memory_space<semaphore_mem>>
    %394 = tpu.memref_squeeze %393 : memref<1x!tpu.dma_semaphore, #tpu.memory_space<semaphore_mem>> -> memref<!tpu.dma_semaphore, #tpu.memory_space<semaphore_mem>>
    tpu.wait_dma2 semaphore(%394 : memref<!tpu.dma_semaphore, #tpu.memory_space<semaphore_mem>>) src(%390 : memref<1x128xf32, #tpu.memory_space<any>>) dst(%392 : memref<1x128xf32, #tpu.memory_space<vmem>>)
    %c0_i32_260 = arith.constant 0 : i32
    %c3_i32_261 = arith.constant 3 : i32
    %395 = tpu.memref_slice %arg3[%53, %54, %2] : memref<16x16x128xf32, #tpu.memory_space<any>> -> memref<1x1x128xf32, #tpu.memory_space<any>>
    %396 = tpu.memref_squeeze %395 : memref<1x1x128xf32, #tpu.memory_space<any>> -> memref<1x128xf32, #tpu.memory_space<any>>
    %c3_i32_262 = arith.constant 3 : i32
    %c0_i32_263 = arith.constant 0 : i32
    %397 = tpu.memref_slice %arg4[%c0_i32_260, %c3_i32_262, %c0_i32_263] : memref<4x8x128xf32, #tpu.memory_space<vmem>> -> memref<1x1x128xf32, #tpu.memory_space<vmem>>
    %398 = tpu.memref_squeeze %397 : memref<1x1x128xf32, #tpu.memory_space<vmem>> -> memref<1x128xf32, #tpu.memory_space<vmem>>
    %399 = tpu.memref_slice %arg5[%c3_i32_261] : memref<8x!tpu.dma_semaphore, #tpu.memory_space<semaphore_mem>> -> memref<1x!tpu.dma_semaphore, #tpu.memory_space<semaphore_mem>>
    %400 = tpu.memref_squeeze %399 : memref<1x!tpu.dma_semaphore, #tpu.memory_space<semaphore_mem>> -> memref<!tpu.dma_semaphore, #tpu.memory_space<semaphore_mem>>
    tpu.wait_dma2 semaphore(%400 : memref<!tpu.dma_semaphore, #tpu.memory_space<semaphore_mem>>) src(%396 : memref<1x128xf32, #tpu.memory_space<any>>) dst(%398 : memref<1x128xf32, #tpu.memory_space<vmem>>)
    %c1_i32_264 = arith.constant 1 : i32
    %c3_i32_265 = arith.constant 3 : i32
    %401 = tpu.memref_slice %arg3[%57, %58, %2] : memref<16x16x128xf32, #tpu.memory_space<any>> -> memref<1x1x128xf32, #tpu.memory_space<any>>
    %402 = tpu.memref_squeeze %401 : memref<1x1x128xf32, #tpu.memory_space<any>> -> memref<1x128xf32, #tpu.memory_space<any>>
    %c3_i32_266 = arith.constant 3 : i32
    %c0_i32_267 = arith.constant 0 : i32
    %403 = tpu.memref_slice %arg4[%c1_i32_264, %c3_i32_266, %c0_i32_267] : memref<4x8x128xf32, #tpu.memory_space<vmem>> -> memref<1x1x128xf32, #tpu.memory_space<vmem>>
    %404 = tpu.memref_squeeze %403 : memref<1x1x128xf32, #tpu.memory_space<vmem>> -> memref<1x128xf32, #tpu.memory_space<vmem>>
    %405 = tpu.memref_slice %arg5[%c3_i32_265] : memref<8x!tpu.dma_semaphore, #tpu.memory_space<semaphore_mem>> -> memref<1x!tpu.dma_semaphore, #tpu.memory_space<semaphore_mem>>
    %406 = tpu.memref_squeeze %405 : memref<1x!tpu.dma_semaphore, #tpu.memory_space<semaphore_mem>> -> memref<!tpu.dma_semaphore, #tpu.memory_space<semaphore_mem>>
    tpu.wait_dma2 semaphore(%406 : memref<!tpu.dma_semaphore, #tpu.memory_space<semaphore_mem>>) src(%402 : memref<1x128xf32, #tpu.memory_space<any>>) dst(%404 : memref<1x128xf32, #tpu.memory_space<vmem>>)
    %c2_i32_268 = arith.constant 2 : i32
    %c3_i32_269 = arith.constant 3 : i32
    %407 = tpu.memref_slice %arg3[%61, %62, %2] : memref<16x16x128xf32, #tpu.memory_space<any>> -> memref<1x1x128xf32, #tpu.memory_space<any>>
    %408 = tpu.memref_squeeze %407 : memref<1x1x128xf32, #tpu.memory_space<any>> -> memref<1x128xf32, #tpu.memory_space<any>>
    %c3_i32_270 = arith.constant 3 : i32
    %c0_i32_271 = arith.constant 0 : i32
    %409 = tpu.memref_slice %arg4[%c2_i32_268, %c3_i32_270, %c0_i32_271] : memref<4x8x128xf32, #tpu.memory_space<vmem>> -> memref<1x1x128xf32, #tpu.memory_space<vmem>>
    %410 = tpu.memref_squeeze %409 : memref<1x1x128xf32, #tpu.memory_space<vmem>> -> memref<1x128xf32, #tpu.memory_space<vmem>>
    %411 = tpu.memref_slice %arg5[%c3_i32_269] : memref<8x!tpu.dma_semaphore, #tpu.memory_space<semaphore_mem>> -> memref<1x!tpu.dma_semaphore, #tpu.memory_space<semaphore_mem>>
    %412 = tpu.memref_squeeze %411 : memref<1x!tpu.dma_semaphore, #tpu.memory_space<semaphore_mem>> -> memref<!tpu.dma_semaphore, #tpu.memory_space<semaphore_mem>>
    tpu.wait_dma2 semaphore(%412 : memref<!tpu.dma_semaphore, #tpu.memory_space<semaphore_mem>>) src(%408 : memref<1x128xf32, #tpu.memory_space<any>>) dst(%410 : memref<1x128xf32, #tpu.memory_space<vmem>>)
    %c3_i32_272 = arith.constant 3 : i32
    %c3_i32_273 = arith.constant 3 : i32
    %413 = tpu.memref_slice %arg3[%65, %66, %2] : memref<16x16x128xf32, #tpu.memory_space<any>> -> memref<1x1x128xf32, #tpu.memory_space<any>>
    %414 = tpu.memref_squeeze %413 : memref<1x1x128xf32, #tpu.memory_space<any>> -> memref<1x128xf32, #tpu.memory_space<any>>
    %c3_i32_274 = arith.constant 3 : i32
    %c0_i32_275 = arith.constant 0 : i32
    %415 = tpu.memref_slice %arg4[%c3_i32_272, %c3_i32_274, %c0_i32_275] : memref<4x8x128xf32, #tpu.memory_space<vmem>> -> memref<1x1x128xf32, #tpu.memory_space<vmem>>
    %416 = tpu.memref_squeeze %415 : memref<1x1x128xf32, #tpu.memory_space<vmem>> -> memref<1x128xf32, #tpu.memory_space<vmem>>
    %417 = tpu.memref_slice %arg5[%c3_i32_273] : memref<8x!tpu.dma_semaphore, #tpu.memory_space<semaphore_mem>> -> memref<1x!tpu.dma_semaphore, #tpu.memory_space<semaphore_mem>>
    %418 = tpu.memref_squeeze %417 : memref<1x!tpu.dma_semaphore, #tpu.memory_space<semaphore_mem>> -> memref<!tpu.dma_semaphore, #tpu.memory_space<semaphore_mem>>
    tpu.wait_dma2 semaphore(%418 : memref<!tpu.dma_semaphore, #tpu.memory_space<semaphore_mem>>) src(%414 : memref<1x128xf32, #tpu.memory_space<any>>) dst(%416 : memref<1x128xf32, #tpu.memory_space<vmem>>)
    %c0_i32_276 = arith.constant 0 : i32
    %c4_i32_277 = arith.constant 4 : i32
    %419 = tpu.memref_slice %arg3[%69, %70, %2] : memref<16x16x128xf32, #tpu.memory_space<any>> -> memref<1x1x128xf32, #tpu.memory_space<any>>
    %420 = tpu.memref_squeeze %419 : memref<1x1x128xf32, #tpu.memory_space<any>> -> memref<1x128xf32, #tpu.memory_space<any>>
    %c4_i32_278 = arith.constant 4 : i32
    %c0_i32_279 = arith.constant 0 : i32
    %421 = tpu.memref_slice %arg4[%c0_i32_276, %c4_i32_278, %c0_i32_279] : memref<4x8x128xf32, #tpu.memory_space<vmem>> -> memref<1x1x128xf32, #tpu.memory_space<vmem>>
    %422 = tpu.memref_squeeze %421 : memref<1x1x128xf32, #tpu.memory_space<vmem>> -> memref<1x128xf32, #tpu.memory_space<vmem>>
    %423 = tpu.memref_slice %arg5[%c4_i32_277] : memref<8x!tpu.dma_semaphore, #tpu.memory_space<semaphore_mem>> -> memref<1x!tpu.dma_semaphore, #tpu.memory_space<semaphore_mem>>
    %424 = tpu.memref_squeeze %423 : memref<1x!tpu.dma_semaphore, #tpu.memory_space<semaphore_mem>> -> memref<!tpu.dma_semaphore, #tpu.memory_space<semaphore_mem>>
    tpu.wait_dma2 semaphore(%424 : memref<!tpu.dma_semaphore, #tpu.memory_space<semaphore_mem>>) src(%420 : memref<1x128xf32, #tpu.memory_space<any>>) dst(%422 : memref<1x128xf32, #tpu.memory_space<vmem>>)
    %c1_i32_280 = arith.constant 1 : i32
    %c4_i32_281 = arith.constant 4 : i32
    %425 = tpu.memref_slice %arg3[%73, %74, %2] : memref<16x16x128xf32, #tpu.memory_space<any>> -> memref<1x1x128xf32, #tpu.memory_space<any>>
    %426 = tpu.memref_squeeze %425 : memref<1x1x128xf32, #tpu.memory_space<any>> -> memref<1x128xf32, #tpu.memory_space<any>>
    %c4_i32_282 = arith.constant 4 : i32
    %c0_i32_283 = arith.constant 0 : i32
    %427 = tpu.memref_slice %arg4[%c1_i32_280, %c4_i32_282, %c0_i32_283] : memref<4x8x128xf32, #tpu.memory_space<vmem>> -> memref<1x1x128xf32, #tpu.memory_space<vmem>>
    %428 = tpu.memref_squeeze %427 : memref<1x1x128xf32, #tpu.memory_space<vmem>> -> memref<1x128xf32, #tpu.memory_space<vmem>>
    %429 = tpu.memref_slice %arg5[%c4_i32_281] : memref<8x!tpu.dma_semaphore, #tpu.memory_space<semaphore_mem>> -> memref<1x!tpu.dma_semaphore, #tpu.memory_space<semaphore_mem>>
    %430 = tpu.memref_squeeze %429 : memref<1x!tpu.dma_semaphore, #tpu.memory_space<semaphore_mem>> -> memref<!tpu.dma_semaphore, #tpu.memory_space<semaphore_mem>>
    tpu.wait_dma2 semaphore(%430 : memref<!tpu.dma_semaphore, #tpu.memory_space<semaphore_mem>>) src(%426 : memref<1x128xf32, #tpu.memory_space<any>>) dst(%428 : memref<1x128xf32, #tpu.memory_space<vmem>>)
    %c2_i32_284 = arith.constant 2 : i32
    %c4_i32_285 = arith.constant 4 : i32
    %431 = tpu.memref_slice %arg3[%77, %78, %2] : memref<16x16x128xf32, #tpu.memory_space<any>> -> memref<1x1x128xf32, #tpu.memory_space<any>>
    %432 = tpu.memref_squeeze %431 : memref<1x1x128xf32, #tpu.memory_space<any>> -> memref<1x128xf32, #tpu.memory_space<any>>
    %c4_i32_286 = arith.constant 4 : i32
    %c0_i32_287 = arith.constant 0 : i32
    %433 = tpu.memref_slice %arg4[%c2_i32_284, %c4_i32_286, %c0_i32_287] : memref<4x8x128xf32, #tpu.memory_space<vmem>> -> memref<1x1x128xf32, #tpu.memory_space<vmem>>
    %434 = tpu.memref_squeeze %433 : memref<1x1x128xf32, #tpu.memory_space<vmem>> -> memref<1x128xf32, #tpu.memory_space<vmem>>
    %435 = tpu.memref_slice %arg5[%c4_i32_285] : memref<8x!tpu.dma_semaphore, #tpu.memory_space<semaphore_mem>> -> memref<1x!tpu.dma_semaphore, #tpu.memory_space<semaphore_mem>>
    %436 = tpu.memref_squeeze %435 : memref<1x!tpu.dma_semaphore, #tpu.memory_space<semaphore_mem>> -> memref<!tpu.dma_semaphore, #tpu.memory_space<semaphore_mem>>
    tpu.wait_dma2 semaphore(%436 : memref<!tpu.dma_semaphore, #tpu.memory_space<semaphore_mem>>) src(%432 : memref<1x128xf32, #tpu.memory_space<any>>) dst(%434 : memref<1x128xf32, #tpu.memory_space<vmem>>)
    %c3_i32_288 = arith.constant 3 : i32
    %c4_i32_289 = arith.constant 4 : i32
    %437 = tpu.memref_slice %arg3[%81, %82, %2] : memref<16x16x128xf32, #tpu.memory_space<any>> -> memref<1x1x128xf32, #tpu.memory_space<any>>
    %438 = tpu.memref_squeeze %437 : memref<1x1x128xf32, #tpu.memory_space<any>> -> memref<1x128xf32, #tpu.memory_space<any>>
    %c4_i32_290 = arith.constant 4 : i32
    %c0_i32_291 = arith.constant 0 : i32
    %439 = tpu.memref_slice %arg4[%c3_i32_288, %c4_i32_290, %c0_i32_291] : memref<4x8x128xf32, #tpu.memory_space<vmem>> -> memref<1x1x128xf32, #tpu.memory_space<vmem>>
    %440 = tpu.memref_squeeze %439 : memref<1x1x128xf32, #tpu.memory_space<vmem>> -> memref<1x128xf32, #tpu.memory_space<vmem>>
    %441 = tpu.memref_slice %arg5[%c4_i32_289] : memref<8x!tpu.dma_semaphore, #tpu.memory_space<semaphore_mem>> -> memref<1x!tpu.dma_semaphore, #tpu.memory_space<semaphore_mem>>
    %442 = tpu.memref_squeeze %441 : memref<1x!tpu.dma_semaphore, #tpu.memory_space<semaphore_mem>> -> memref<!tpu.dma_semaphore, #tpu.memory_space<semaphore_mem>>
    tpu.wait_dma2 semaphore(%442 : memref<!tpu.dma_semaphore, #tpu.memory_space<semaphore_mem>>) src(%438 : memref<1x128xf32, #tpu.memory_space<any>>) dst(%440 : memref<1x128xf32, #tpu.memory_space<vmem>>)
    %c0_i32_292 = arith.constant 0 : i32
    %c5_i32_293 = arith.constant 5 : i32
    %443 = tpu.memref_slice %arg3[%85, %86, %2] : memref<16x16x128xf32, #tpu.memory_space<any>> -> memref<1x1x128xf32, #tpu.memory_space<any>>
    %444 = tpu.memref_squeeze %443 : memref<1x1x128xf32, #tpu.memory_space<any>> -> memref<1x128xf32, #tpu.memory_space<any>>
    %c5_i32_294 = arith.constant 5 : i32
    %c0_i32_295 = arith.constant 0 : i32
    %445 = tpu.memref_slice %arg4[%c0_i32_292, %c5_i32_294, %c0_i32_295] : memref<4x8x128xf32, #tpu.memory_space<vmem>> -> memref<1x1x128xf32, #tpu.memory_space<vmem>>
    %446 = tpu.memref_squeeze %445 : memref<1x1x128xf32, #tpu.memory_space<vmem>> -> memref<1x128xf32, #tpu.memory_space<vmem>>
    %447 = tpu.memref_slice %arg5[%c5_i32_293] : memref<8x!tpu.dma_semaphore, #tpu.memory_space<semaphore_mem>> -> memref<1x!tpu.dma_semaphore, #tpu.memory_space<semaphore_mem>>
    %448 = tpu.memref_squeeze %447 : memref<1x!tpu.dma_semaphore, #tpu.memory_space<semaphore_mem>> -> memref<!tpu.dma_semaphore, #tpu.memory_space<semaphore_mem>>
    tpu.wait_dma2 semaphore(%448 : memref<!tpu.dma_semaphore, #tpu.memory_space<semaphore_mem>>) src(%444 : memref<1x128xf32, #tpu.memory_space<any>>) dst(%446 : memref<1x128xf32, #tpu.memory_space<vmem>>)
    %c1_i32_296 = arith.constant 1 : i32
    %c5_i32_297 = arith.constant 5 : i32
    %449 = tpu.memref_slice %arg3[%89, %90, %2] : memref<16x16x128xf32, #tpu.memory_space<any>> -> memref<1x1x128xf32, #tpu.memory_space<any>>
    %450 = tpu.memref_squeeze %449 : memref<1x1x128xf32, #tpu.memory_space<any>> -> memref<1x128xf32, #tpu.memory_space<any>>
    %c5_i32_298 = arith.constant 5 : i32
    %c0_i32_299 = arith.constant 0 : i32
    %451 = tpu.memref_slice %arg4[%c1_i32_296, %c5_i32_298, %c0_i32_299] : memref<4x8x128xf32, #tpu.memory_space<vmem>> -> memref<1x1x128xf32, #tpu.memory_space<vmem>>
    %452 = tpu.memref_squeeze %451 : memref<1x1x128xf32, #tpu.memory_space<vmem>> -> memref<1x128xf32, #tpu.memory_space<vmem>>
    %453 = tpu.memref_slice %arg5[%c5_i32_297] : memref<8x!tpu.dma_semaphore, #tpu.memory_space<semaphore_mem>> -> memref<1x!tpu.dma_semaphore, #tpu.memory_space<semaphore_mem>>
    %454 = tpu.memref_squeeze %453 : memref<1x!tpu.dma_semaphore, #tpu.memory_space<semaphore_mem>> -> memref<!tpu.dma_semaphore, #tpu.memory_space<semaphore_mem>>
    tpu.wait_dma2 semaphore(%454 : memref<!tpu.dma_semaphore, #tpu.memory_space<semaphore_mem>>) src(%450 : memref<1x128xf32, #tpu.memory_space<any>>) dst(%452 : memref<1x128xf32, #tpu.memory_space<vmem>>)
    %c2_i32_300 = arith.constant 2 : i32
    %c5_i32_301 = arith.constant 5 : i32
    %455 = tpu.memref_slice %arg3[%93, %94, %2] : memref<16x16x128xf32, #tpu.memory_space<any>> -> memref<1x1x128xf32, #tpu.memory_space<any>>
    %456 = tpu.memref_squeeze %455 : memref<1x1x128xf32, #tpu.memory_space<any>> -> memref<1x128xf32, #tpu.memory_space<any>>
    %c5_i32_302 = arith.constant 5 : i32
    %c0_i32_303 = arith.constant 0 : i32
    %457 = tpu.memref_slice %arg4[%c2_i32_300, %c5_i32_302, %c0_i32_303] : memref<4x8x128xf32, #tpu.memory_space<vmem>> -> memref<1x1x128xf32, #tpu.memory_space<vmem>>
    %458 = tpu.memref_squeeze %457 : memref<1x1x128xf32, #tpu.memory_space<vmem>> -> memref<1x128xf32, #tpu.memory_space<vmem>>
    %459 = tpu.memref_slice %arg5[%c5_i32_301] : memref<8x!tpu.dma_semaphore, #tpu.memory_space<semaphore_mem>> -> memref<1x!tpu.dma_semaphore, #tpu.memory_space<semaphore_mem>>
    %460 = tpu.memref_squeeze %459 : memref<1x!tpu.dma_semaphore, #tpu.memory_space<semaphore_mem>> -> memref<!tpu.dma_semaphore, #tpu.memory_space<semaphore_mem>>
    tpu.wait_dma2 semaphore(%460 : memref<!tpu.dma_semaphore, #tpu.memory_space<semaphore_mem>>) src(%456 : memref<1x128xf32, #tpu.memory_space<any>>) dst(%458 : memref<1x128xf32, #tpu.memory_space<vmem>>)
    %c3_i32_304 = arith.constant 3 : i32
    %c5_i32_305 = arith.constant 5 : i32
    %461 = tpu.memref_slice %arg3[%97, %98, %2] : memref<16x16x128xf32, #tpu.memory_space<any>> -> memref<1x1x128xf32, #tpu.memory_space<any>>
    %462 = tpu.memref_squeeze %461 : memref<1x1x128xf32, #tpu.memory_space<any>> -> memref<1x128xf32, #tpu.memory_space<any>>
    %c5_i32_306 = arith.constant 5 : i32
    %c0_i32_307 = arith.constant 0 : i32
    %463 = tpu.memref_slice %arg4[%c3_i32_304, %c5_i32_306, %c0_i32_307] : memref<4x8x128xf32, #tpu.memory_space<vmem>> -> memref<1x1x128xf32, #tpu.memory_space<vmem>>
    %464 = tpu.memref_squeeze %463 : memref<1x1x128xf32, #tpu.memory_space<vmem>> -> memref<1x128xf32, #tpu.memory_space<vmem>>
    %465 = tpu.memref_slice %arg5[%c5_i32_305] : memref<8x!tpu.dma_semaphore, #tpu.memory_space<semaphore_mem>> -> memref<1x!tpu.dma_semaphore, #tpu.memory_space<semaphore_mem>>
    %466 = tpu.memref_squeeze %465 : memref<1x!tpu.dma_semaphore, #tpu.memory_space<semaphore_mem>> -> memref<!tpu.dma_semaphore, #tpu.memory_space<semaphore_mem>>
    tpu.wait_dma2 semaphore(%466 : memref<!tpu.dma_semaphore, #tpu.memory_space<semaphore_mem>>) src(%462 : memref<1x128xf32, #tpu.memory_space<any>>) dst(%464 : memref<1x128xf32, #tpu.memory_space<vmem>>)
    %c0_i32_308 = arith.constant 0 : i32
    %c6_i32_309 = arith.constant 6 : i32
    %467 = tpu.memref_slice %arg3[%101, %102, %2] : memref<16x16x128xf32, #tpu.memory_space<any>> -> memref<1x1x128xf32, #tpu.memory_space<any>>
    %468 = tpu.memref_squeeze %467 : memref<1x1x128xf32, #tpu.memory_space<any>> -> memref<1x128xf32, #tpu.memory_space<any>>
    %c6_i32_310 = arith.constant 6 : i32
    %c0_i32_311 = arith.constant 0 : i32
    %469 = tpu.memref_slice %arg4[%c0_i32_308, %c6_i32_310, %c0_i32_311] : memref<4x8x128xf32, #tpu.memory_space<vmem>> -> memref<1x1x128xf32, #tpu.memory_space<vmem>>
    %470 = tpu.memref_squeeze %469 : memref<1x1x128xf32, #tpu.memory_space<vmem>> -> memref<1x128xf32, #tpu.memory_space<vmem>>
    %471 = tpu.memref_slice %arg5[%c6_i32_309] : memref<8x!tpu.dma_semaphore, #tpu.memory_space<semaphore_mem>> -> memref<1x!tpu.dma_semaphore, #tpu.memory_space<semaphore_mem>>
    %472 = tpu.memref_squeeze %471 : memref<1x!tpu.dma_semaphore, #tpu.memory_space<semaphore_mem>> -> memref<!tpu.dma_semaphore, #tpu.memory_space<semaphore_mem>>
    tpu.wait_dma2 semaphore(%472 : memref<!tpu.dma_semaphore, #tpu.memory_space<semaphore_mem>>) src(%468 : memref<1x128xf32, #tpu.memory_space<any>>) dst(%470 : memref<1x128xf32, #tpu.memory_space<vmem>>)
    %c1_i32_312 = arith.constant 1 : i32
    %c6_i32_313 = arith.constant 6 : i32
    %473 = tpu.memref_slice %arg3[%105, %106, %2] : memref<16x16x128xf32, #tpu.memory_space<any>> -> memref<1x1x128xf32, #tpu.memory_space<any>>
    %474 = tpu.memref_squeeze %473 : memref<1x1x128xf32, #tpu.memory_space<any>> -> memref<1x128xf32, #tpu.memory_space<any>>
    %c6_i32_314 = arith.constant 6 : i32
    %c0_i32_315 = arith.constant 0 : i32
    %475 = tpu.memref_slice %arg4[%c1_i32_312, %c6_i32_314, %c0_i32_315] : memref<4x8x128xf32, #tpu.memory_space<vmem>> -> memref<1x1x128xf32, #tpu.memory_space<vmem>>
    %476 = tpu.memref_squeeze %475 : memref<1x1x128xf32, #tpu.memory_space<vmem>> -> memref<1x128xf32, #tpu.memory_space<vmem>>
    %477 = tpu.memref_slice %arg5[%c6_i32_313] : memref<8x!tpu.dma_semaphore, #tpu.memory_space<semaphore_mem>> -> memref<1x!tpu.dma_semaphore, #tpu.memory_space<semaphore_mem>>
    %478 = tpu.memref_squeeze %477 : memref<1x!tpu.dma_semaphore, #tpu.memory_space<semaphore_mem>> -> memref<!tpu.dma_semaphore, #tpu.memory_space<semaphore_mem>>
    tpu.wait_dma2 semaphore(%478 : memref<!tpu.dma_semaphore, #tpu.memory_space<semaphore_mem>>) src(%474 : memref<1x128xf32, #tpu.memory_space<any>>) dst(%476 : memref<1x128xf32, #tpu.memory_space<vmem>>)
    %c2_i32_316 = arith.constant 2 : i32
    %c6_i32_317 = arith.constant 6 : i32
    %479 = tpu.memref_slice %arg3[%109, %110, %2] : memref<16x16x128xf32, #tpu.memory_space<any>> -> memref<1x1x128xf32, #tpu.memory_space<any>>
    %480 = tpu.memref_squeeze %479 : memref<1x1x128xf32, #tpu.memory_space<any>> -> memref<1x128xf32, #tpu.memory_space<any>>
    %c6_i32_318 = arith.constant 6 : i32
    %c0_i32_319 = arith.constant 0 : i32
    %481 = tpu.memref_slice %arg4[%c2_i32_316, %c6_i32_318, %c0_i32_319] : memref<4x8x128xf32, #tpu.memory_space<vmem>> -> memref<1x1x128xf32, #tpu.memory_space<vmem>>
    %482 = tpu.memref_squeeze %481 : memref<1x1x128xf32, #tpu.memory_space<vmem>> -> memref<1x128xf32, #tpu.memory_space<vmem>>
    %483 = tpu.memref_slice %arg5[%c6_i32_317] : memref<8x!tpu.dma_semaphore, #tpu.memory_space<semaphore_mem>> -> memref<1x!tpu.dma_semaphore, #tpu.memory_space<semaphore_mem>>
    %484 = tpu.memref_squeeze %483 : memref<1x!tpu.dma_semaphore, #tpu.memory_space<semaphore_mem>> -> memref<!tpu.dma_semaphore, #tpu.memory_space<semaphore_mem>>
    tpu.wait_dma2 semaphore(%484 : memref<!tpu.dma_semaphore, #tpu.memory_space<semaphore_mem>>) src(%480 : memref<1x128xf32, #tpu.memory_space<any>>) dst(%482 : memref<1x128xf32, #tpu.memory_space<vmem>>)
    %c3_i32_320 = arith.constant 3 : i32
    %c6_i32_321 = arith.constant 6 : i32
    %485 = tpu.memref_slice %arg3[%113, %114, %2] : memref<16x16x128xf32, #tpu.memory_space<any>> -> memref<1x1x128xf32, #tpu.memory_space<any>>
    %486 = tpu.memref_squeeze %485 : memref<1x1x128xf32, #tpu.memory_space<any>> -> memref<1x128xf32, #tpu.memory_space<any>>
    %c6_i32_322 = arith.constant 6 : i32
    %c0_i32_323 = arith.constant 0 : i32
    %487 = tpu.memref_slice %arg4[%c3_i32_320, %c6_i32_322, %c0_i32_323] : memref<4x8x128xf32, #tpu.memory_space<vmem>> -> memref<1x1x128xf32, #tpu.memory_space<vmem>>
    %488 = tpu.memref_squeeze %487 : memref<1x1x128xf32, #tpu.memory_space<vmem>> -> memref<1x128xf32, #tpu.memory_space<vmem>>
    %489 = tpu.memref_slice %arg5[%c6_i32_321] : memref<8x!tpu.dma_semaphore, #tpu.memory_space<semaphore_mem>> -> memref<1x!tpu.dma_semaphore, #tpu.memory_space<semaphore_mem>>
    %490 = tpu.memref_squeeze %489 : memref<1x!tpu.dma_semaphore, #tpu.memory_space<semaphore_mem>> -> memref<!tpu.dma_semaphore, #tpu.memory_space<semaphore_mem>>
    tpu.wait_dma2 semaphore(%490 : memref<!tpu.dma_semaphore, #tpu.memory_space<semaphore_mem>>) src(%486 : memref<1x128xf32, #tpu.memory_space<any>>) dst(%488 : memref<1x128xf32, #tpu.memory_space<vmem>>)
    %c0_i32_324 = arith.constant 0 : i32
    %c7_i32_325 = arith.constant 7 : i32
    %491 = tpu.memref_slice %arg3[%117, %118, %2] : memref<16x16x128xf32, #tpu.memory_space<any>> -> memref<1x1x128xf32, #tpu.memory_space<any>>
    %492 = tpu.memref_squeeze %491 : memref<1x1x128xf32, #tpu.memory_space<any>> -> memref<1x128xf32, #tpu.memory_space<any>>
    %c7_i32_326 = arith.constant 7 : i32
    %c0_i32_327 = arith.constant 0 : i32
    %493 = tpu.memref_slice %arg4[%c0_i32_324, %c7_i32_326, %c0_i32_327] : memref<4x8x128xf32, #tpu.memory_space<vmem>> -> memref<1x1x128xf32, #tpu.memory_space<vmem>>
    %494 = tpu.memref_squeeze %493 : memref<1x1x128xf32, #tpu.memory_space<vmem>> -> memref<1x128xf32, #tpu.memory_space<vmem>>
    %495 = tpu.memref_slice %arg5[%c7_i32_325] : memref<8x!tpu.dma_semaphore, #tpu.memory_space<semaphore_mem>> -> memref<1x!tpu.dma_semaphore, #tpu.memory_space<semaphore_mem>>
    %496 = tpu.memref_squeeze %495 : memref<1x!tpu.dma_semaphore, #tpu.memory_space<semaphore_mem>> -> memref<!tpu.dma_semaphore, #tpu.memory_space<semaphore_mem>>
    tpu.wait_dma2 semaphore(%496 : memref<!tpu.dma_semaphore, #tpu.memory_space<semaphore_mem>>) src(%492 : memref<1x128xf32, #tpu.memory_space<any>>) dst(%494 : memref<1x128xf32, #tpu.memory_space<vmem>>)
    %c1_i32_328 = arith.constant 1 : i32
    %c7_i32_329 = arith.constant 7 : i32
    %497 = tpu.memref_slice %arg3[%121, %122, %2] : memref<16x16x128xf32, #tpu.memory_space<any>> -> memref<1x1x128xf32, #tpu.memory_space<any>>
    %498 = tpu.memref_squeeze %497 : memref<1x1x128xf32, #tpu.memory_space<any>> -> memref<1x128xf32, #tpu.memory_space<any>>
    %c7_i32_330 = arith.constant 7 : i32
    %c0_i32_331 = arith.constant 0 : i32
    %499 = tpu.memref_slice %arg4[%c1_i32_328, %c7_i32_330, %c0_i32_331] : memref<4x8x128xf32, #tpu.memory_space<vmem>> -> memref<1x1x128xf32, #tpu.memory_space<vmem>>
    %500 = tpu.memref_squeeze %499 : memref<1x1x128xf32, #tpu.memory_space<vmem>> -> memref<1x128xf32, #tpu.memory_space<vmem>>
    %501 = tpu.memref_slice %arg5[%c7_i32_329] : memref<8x!tpu.dma_semaphore, #tpu.memory_space<semaphore_mem>> -> memref<1x!tpu.dma_semaphore, #tpu.memory_space<semaphore_mem>>
    %502 = tpu.memref_squeeze %501 : memref<1x!tpu.dma_semaphore, #tpu.memory_space<semaphore_mem>> -> memref<!tpu.dma_semaphore, #tpu.memory_space<semaphore_mem>>
    tpu.wait_dma2 semaphore(%502 : memref<!tpu.dma_semaphore, #tpu.memory_space<semaphore_mem>>) src(%498 : memref<1x128xf32, #tpu.memory_space<any>>) dst(%500 : memref<1x128xf32, #tpu.memory_space<vmem>>)
    %c2_i32_332 = arith.constant 2 : i32
    %c7_i32_333 = arith.constant 7 : i32
    %503 = tpu.memref_slice %arg3[%125, %126, %2] : memref<16x16x128xf32, #tpu.memory_space<any>> -> memref<1x1x128xf32, #tpu.memory_space<any>>
    %504 = tpu.memref_squeeze %503 : memref<1x1x128xf32, #tpu.memory_space<any>> -> memref<1x128xf32, #tpu.memory_space<any>>
    %c7_i32_334 = arith.constant 7 : i32
    %c0_i32_335 = arith.constant 0 : i32
    %505 = tpu.memref_slice %arg4[%c2_i32_332, %c7_i32_334, %c0_i32_335] : memref<4x8x128xf32, #tpu.memory_space<vmem>> -> memref<1x1x128xf32, #tpu.memory_space<vmem>>
    %506 = tpu.memref_squeeze %505 : memref<1x1x128xf32, #tpu.memory_space<vmem>> -> memref<1x128xf32, #tpu.memory_space<vmem>>
    %507 = tpu.memref_slice %arg5[%c7_i32_333] : memref<8x!tpu.dma_semaphore, #tpu.memory_space<semaphore_mem>> -> memref<1x!tpu.dma_semaphore, #tpu.memory_space<semaphore_mem>>
    %508 = tpu.memref_squeeze %507 : memref<1x!tpu.dma_semaphore, #tpu.memory_space<semaphore_mem>> -> memref<!tpu.dma_semaphore, #tpu.memory_space<semaphore_mem>>
    tpu.wait_dma2 semaphore(%508 : memref<!tpu.dma_semaphore, #tpu.memory_space<semaphore_mem>>) src(%504 : memref<1x128xf32, #tpu.memory_space<any>>) dst(%506 : memref<1x128xf32, #tpu.memory_space<vmem>>)
    %c3_i32_336 = arith.constant 3 : i32
    %c7_i32_337 = arith.constant 7 : i32
    %509 = tpu.memref_slice %arg3[%129, %130, %2] : memref<16x16x128xf32, #tpu.memory_space<any>> -> memref<1x1x128xf32, #tpu.memory_space<any>>
    %510 = tpu.memref_squeeze %509 : memref<1x1x128xf32, #tpu.memory_space<any>> -> memref<1x128xf32, #tpu.memory_space<any>>
    %c7_i32_338 = arith.constant 7 : i32
    %c0_i32_339 = arith.constant 0 : i32
    %511 = tpu.memref_slice %arg4[%c3_i32_336, %c7_i32_338, %c0_i32_339] : memref<4x8x128xf32, #tpu.memory_space<vmem>> -> memref<1x1x128xf32, #tpu.memory_space<vmem>>
    %512 = tpu.memref_squeeze %511 : memref<1x1x128xf32, #tpu.memory_space<vmem>> -> memref<1x128xf32, #tpu.memory_space<vmem>>
    %513 = tpu.memref_slice %arg5[%c7_i32_337] : memref<8x!tpu.dma_semaphore, #tpu.memory_space<semaphore_mem>> -> memref<1x!tpu.dma_semaphore, #tpu.memory_space<semaphore_mem>>
    %514 = tpu.memref_squeeze %513 : memref<1x!tpu.dma_semaphore, #tpu.memory_space<semaphore_mem>> -> memref<!tpu.dma_semaphore, #tpu.memory_space<semaphore_mem>>
    tpu.wait_dma2 semaphore(%514 : memref<!tpu.dma_semaphore, #tpu.memory_space<semaphore_mem>>) src(%510 : memref<1x128xf32, #tpu.memory_space<any>>) dst(%512 : memref<1x128xf32, #tpu.memory_space<vmem>>)
    return
  }
  func.func @transform_1(%arg0: i32, %arg1: i32, %arg2: memref<16x16xi32, #tpu.memory_space<smem>>) -> (i32, i32, i32) {
    %c0_i32 = arith.constant 0 : i32
    %c0_i32_0 = arith.constant 0 : i32
    return %c0_i32, %arg0, %arg1 : i32, i32, i32
  }
}

</mosaic_0001>

<llo_original>
// kernel: tpu_custom_call.1
$region0: #{tpu_custom_call.1}
  #allocation0 [shape = 'u32[]', space=smem, size = 0x4, offset = 0x4, fixed_abs, tag = 'smem constant byte address 0x4 - core index']
  #allocation1 [shape = 'u32[144,128]{1,0:T(1,128)}', space=vmem, size = 0x12000, scoped, tag = 'internal scratch']
  #allocation2 [shape = 's32[8]{0}', space=sflag, size = 0x20, scoped, tag = 'scratch operand']
  #allocation3 [shape = 's32[1]{0}', space=sflag, size = 0x4, scoped, tag = 'scoped memory for tpu_custom_call.1']
  #allocation4 [shape = 'u8[8192]{0}', space=smem, size = 0x2000, scoped, tag = 'prefetched SMEM operand 0']
  #allocation7 [shape = 's32[]', space=sflag, size = 0x4, offset = 0, fixed_abs, tag = 'sflag constant byte address 0x0 - dummy sync flag']
  #allocation8 [shape = 's32[]', space=sflag, size = 0x4, offset = 0, fixed_abs, tag = 'sflag constant byte address 0x0 - dummy sync flag']
  #allocation9 [shape = 'u32[]', space=smem, size = 0x4, offset = 0x44, fixed_abs, tag = 'smem constant byte address 0x44 - assertion arg 0']
  #allocation10 [shape = 'u32[]', space=smem, size = 0x4, offset = 0x48, fixed_abs, tag = 'smem constant byte address 0x48 - assertion arg 1']
  #allocation11 [shape = 's32[]', space=sflag, size = 0x4, offset = 0, fixed_abs, tag = 'sflag constant byte address 0x0 - dummy sync flag']
  #allocation12 [shape = 's32[]', space=sflag, size = 0x4, offset = 0, fixed_abs, tag = 'sflag constant byte address 0x0 - dummy sync flag']
  #allocation13 [shape = 's32[]', space=sflag, size = 0x4, offset = 0, fixed_abs, tag = 'sflag constant byte address 0x0 - dummy sync flag']
  #allocation14 [shape = 's32[]', space=sflag, size = 0x4, offset = 0, fixed_abs, tag = 'sflag constant byte address 0x0 - dummy sync flag']
  #allocation15 [shape = 's32[]', space=sflag, size = 0x4, offset = 0, fixed_abs, tag = 'sflag constant byte address 0x0 - dummy sync flag']
  #allocation16 [shape = 's32[]', space=sflag, size = 0x4, offset = 0, fixed_abs, tag = 'sflag constant byte address 0x0 - dummy sync flag']
  #allocation17 [shape = 's32[]', space=sflag, size = 0x4, offset = 0, fixed_abs, tag = 'sflag constant byte address 0x0 - dummy sync flag']
  #allocation18 [shape = 's32[]', space=sflag, size = 0x4, offset = 0, fixed_abs, tag = 'sflag constant byte address 0x0 - dummy sync flag']
  #allocation19 [shape = 's32[]', space=sflag, size = 0x4, offset = 0, fixed_abs, tag = 'sflag constant byte address 0x0 - dummy sync flag']
  #allocation20 [shape = 's32[]', space=sflag, size = 0x4, offset = 0, fixed_abs, tag = 'sflag constant byte address 0x0 - dummy sync flag']
  #allocation21 [shape = 's32[]', space=sflag, size = 0x4, offset = 0, fixed_abs, tag = 'sflag constant byte address 0x0 - dummy sync flag']
  #allocation22 [shape = 's32[]', space=sflag, size = 0x4, offset = 0, fixed_abs, tag = 'sflag constant byte address 0x0 - dummy sync flag']
  #allocation23 [shape = 's32[]', space=sflag, size = 0x4, offset = 0, fixed_abs, tag = 'sflag constant byte address 0x0 - dummy sync flag']
  #allocation24 [shape = 's32[]', space=sflag, size = 0x4, offset = 0, fixed_abs, tag = 'sflag constant byte address 0x0 - dummy sync flag']
  #allocation25 [shape = 's32[]', space=sflag, size = 0x4, offset = 0, fixed_abs, tag = 'sflag constant byte address 0x0 - dummy sync flag']
  #allocation26 [shape = 's32[]', space=sflag, size = 0x4, offset = 0, fixed_abs, tag = 'sflag constant byte address 0x0 - dummy sync flag']
  #allocation27 [shape = 's32[]', space=sflag, size = 0x4, offset = 0, fixed_abs, tag = 'sflag constant byte address 0x0 - dummy sync flag']
  #allocation28 [shape = 's32[]', space=sflag, size = 0x4, offset = 0, fixed_abs, tag = 'sflag constant byte address 0x0 - dummy sync flag']
  #allocation29 [shape = 's32[]', space=sflag, size = 0x4, offset = 0, fixed_abs, tag = 'sflag constant byte address 0x0 - dummy sync flag']
  #allocation30 [shape = 's32[]', space=sflag, size = 0x4, offset = 0, fixed_abs, tag = 'sflag constant byte address 0x0 - dummy sync flag']
  #allocation31 [shape = 's32[]', space=sflag, size = 0x4, offset = 0, fixed_abs, tag = 'sflag constant byte address 0x0 - dummy sync flag']
  #allocation32 [shape = 's32[]', space=sflag, size = 0x4, offset = 0, fixed_abs, tag = 'sflag constant byte address 0x0 - dummy sync flag']
  #allocation33 [shape = 's32[]', space=sflag, size = 0x4, offset = 0, fixed_abs, tag = 'sflag constant byte address 0x0 - dummy sync flag']
  #allocation34 [shape = 's32[]', space=sflag, size = 0x4, offset = 0, fixed_abs, tag = 'sflag constant byte address 0x0 - dummy sync flag']
  #allocation35 [shape = 's32[]', space=sflag, size = 0x4, offset = 0, fixed_abs, tag = 'sflag constant byte address 0x0 - dummy sync flag']
  #allocation36 [shape = 's32[]', space=sflag, size = 0x4, offset = 0, fixed_abs, tag = 'sflag constant byte address 0x0 - dummy sync flag']
  #allocation37 [shape = 's32[]', space=sflag, size = 0x4, offset = 0, fixed_abs, tag = 'sflag constant byte address 0x0 - dummy sync flag']
  #allocation38 [shape = 's32[]', space=sflag, size = 0x4, offset = 0, fixed_abs, tag = 'sflag constant byte address 0x0 - dummy sync flag']
  #allocation39 [shape = 's32[]', space=sflag, size = 0x4, offset = 0, fixed_abs, tag = 'sflag constant byte address 0x0 - dummy sync flag']
  #allocation40 [shape = 's32[]', space=sflag, size = 0x4, offset = 0, fixed_abs, tag = 'sflag constant byte address 0x0 - dummy sync flag']
  #allocation41 [shape = 's32[]', space=sflag, size = 0x4, offset = 0, fixed_abs, tag = 'sflag constant byte address 0x0 - dummy sync flag']
  #allocation42 [shape = 's32[]', space=sflag, size = 0x4, offset = 0, fixed_abs, tag = 'sflag constant byte address 0x0 - dummy sync flag']
  #allocation43 [shape = 's32[]', space=sflag, size = 0x4, offset = 0, fixed_abs, tag = 'sflag constant byte address 0x0 - dummy sync flag']
  #allocation44 [shape = 's32[]', space=sflag, size = 0x4, offset = 0, fixed_abs, tag = 'sflag constant byte address 0x0 - dummy sync flag']
  #allocation45 [shape = 's32[]', space=sflag, size = 0x4, offset = 0, fixed_abs, tag = 'sflag constant byte address 0x0 - dummy sync flag']
  #allocation46 [shape = 's32[]', space=sflag, size = 0x4, offset = 0, fixed_abs, tag = 'sflag constant byte address 0x0 - dummy sync flag']
  #allocation47 [shape = 's32[]', space=sflag, size = 0x4, offset = 0, fixed_abs, tag = 'sflag constant byte address 0x0 - dummy sync flag']
  #allocation48 [shape = 's32[]', space=sflag, size = 0x4, offset = 0, fixed_abs, tag = 'sflag constant byte address 0x0 - dummy sync flag']
  #allocation49 [shape = 's32[]', space=sflag, size = 0x4, offset = 0, fixed_abs, tag = 'sflag constant byte address 0x0 - dummy sync flag']
  #allocation50 [shape = 's32[]', space=sflag, size = 0x4, offset = 0, fixed_abs, tag = 'sflag constant byte address 0x0 - dummy sync flag']
  #allocation51 [shape = 's32[]', space=sflag, size = 0x4, offset = 0, fixed_abs, tag = 'sflag constant byte address 0x0 - dummy sync flag']
  #allocation52 [shape = 's32[]', space=sflag, size = 0x4, offset = 0, fixed_abs, tag = 'sflag constant byte address 0x0 - dummy sync flag']
  #allocation53 [shape = 's32[]', space=sflag, size = 0x4, offset = 0, fixed_abs, tag = 'sflag constant byte address 0x0 - dummy sync flag']
  #allocation54 [shape = 's32[]', space=sflag, size = 0x4, offset = 0, fixed_abs, tag = 'sflag constant byte address 0x0 - dummy sync flag']
  #allocation55 [shape = 's32[]', space=sflag, size = 0x4, offset = 0, fixed_abs, tag = 'sflag constant byte address 0x0 - dummy sync flag']
  #allocation56 [shape = 's32[]', space=sflag, size = 0x4, offset = 0, fixed_abs, tag = 'sflag constant byte address 0x0 - dummy sync flag']
  #allocation57 [shape = 's32[]', space=sflag, size = 0x4, offset = 0, fixed_abs, tag = 'sflag constant byte address 0x0 - dummy sync flag']
  #allocation58 [shape = 's32[]', space=sflag, size = 0x4, offset = 0, fixed_abs, tag = 'sflag constant byte address 0x0 - dummy sync flag']
  #allocation59 [shape = 's32[]', space=sflag, size = 0x4, offset = 0, fixed_abs, tag = 'sflag constant byte address 0x0 - dummy sync flag']
  #allocation60 [shape = 's32[]', space=sflag, size = 0x4, offset = 0, fixed_abs, tag = 'sflag constant byte address 0x0 - dummy sync flag']
  #allocation61 [shape = 's32[]', space=sflag, size = 0x4, offset = 0, fixed_abs, tag = 'sflag constant byte address 0x0 - dummy sync flag']
  #allocation62 [shape = 's32[]', space=sflag, size = 0x4, offset = 0, fixed_abs, tag = 'sflag constant byte address 0x0 - dummy sync flag']
  #allocation63 [shape = 's32[]', space=sflag, size = 0x4, offset = 0, fixed_abs, tag = 'sflag constant byte address 0x0 - dummy sync flag']
  #allocation64 [shape = 's32[]', space=sflag, size = 0x4, offset = 0, fixed_abs, tag = 'sflag constant byte address 0x0 - dummy sync flag']
  #allocation65 [shape = 's32[]', space=sflag, size = 0x4, offset = 0, fixed_abs, tag = 'sflag constant byte address 0x0 - dummy sync flag']
  #allocation66 [shape = 's32[]', space=sflag, size = 0x4, offset = 0, fixed_abs, tag = 'sflag constant byte address 0x0 - dummy sync flag']
  #allocation67 [shape = 's32[]', space=sflag, size = 0x4, offset = 0, fixed_abs, tag = 'sflag constant byte address 0x0 - dummy sync flag']
  #allocation68 [shape = 's32[]', space=sflag, size = 0x4, offset = 0, fixed_abs, tag = 'sflag constant byte address 0x0 - dummy sync flag']
  #allocation69 [shape = 's32[]', space=sflag, size = 0x4, offset = 0, fixed_abs, tag = 'sflag constant byte address 0x0 - dummy sync flag']
  #allocation70 [shape = 's32[]', space=sflag, size = 0x4, offset = 0, fixed_abs, tag = 'sflag constant byte address 0x0 - dummy sync flag']
  #allocation71 [shape = 's32[]', space=sflag, size = 0x4, offset = 0, fixed_abs, tag = 'sflag constant byte address 0x0 - dummy sync flag']
  #allocation72 [shape = 's32[]', space=sflag, size = 0x4, offset = 0, fixed_abs, tag = 'sflag constant byte address 0x0 - dummy sync flag']
  %s0 = inlined_call_operand.hbm [shape: s32[16,16], index: 0, kind: input, shape index: {}]
  %s1 = inlined_call_operand.hbm [shape: f32[16,16,128], index: 1, kind: input, shape index: {}]
  %s2 = inlined_call_operand.hbm [shape: f32[4,16,128], index: 2, kind: output, shape index: {}]
  %s3 = sld [smem:[#allocation0]]
  $region153: #{tpu_custom_call.1} parent=0
    _
  %s5 = ssub.s32 1, %s3
  %s6 = scalar_select 0, %s5, %s3
  %8 = dma.hbm_to_smem %s0, 256, [#allocation4], [#allocation3]
  %9 = dma.done [#allocation3], 256
  %10 = sfence
  $region1: #{tpu_custom_call.1} parent=0
    #allocation5 [shape = 'u8[32768]{0}', space=vmem, size = 0x8000, scoped, tag = 'output window, operand 0']
    #allocation6 [shape = 's32[2]{0}', space=sflag, size = 0x8, scoped, tag = 'scoped memory for tpu_custom_call.1']
    %11 = vsyncpa [#allocation6], 0
    %s12 = scalar_lea.sflag [#allocation6], 1
    %13 = vsyncpa %s12, 0
    loop: start=0, step=1, limit=3
    $region2: #{tpu_custom_call.1} parent=1 // loop_pre_header
      _
    $region3: #{tpu_custom_call.1} parent=1 // loop_header
      %s15 = sphi 0, %s19
      %p16 = scmp.ge.s32.totalorder %s15, 3
      %s21 = sphi 0, %s31
      %s22 = sphi 0, %s27
      %s23 = sphi 0, %s21
      %s24 = sphi 0, %s22
      %s36 = sphi 0, %s38
      %s39 = sphi 0, %s36
      %s49 = sphi 0, %s39
    $region4: #{tpu_custom_call.1} parent=1 // loop_header_branch
      %18 = sbr.rel (%p16) target = $region8
    $region5: #{tpu_custom_call.1} parent=1 // loop_body
      %s20 = ssub.s32 %s15, 1
      %s25 = sadd.s32 1, %s22
      %p26 = scmp.ge.s32.totalorder %s25, 1
      %s27 = scalar_select %p26, 0, %s25
      %s28 = sadd.s32 1, %s21
      %s29 = scalar_select %p26, %s28, %s21
      %p30 = scmp.ge.s32.totalorder %s29, 2
      %s31 = scalar_select %p30, 0, %s29
      %s32 = ssub.s32 %s21, %s31
      %s33 = ssub.s32 %s22, %s27
      %s34 = sor.u32 %s32, %s33
      %p35 = scmp.eq.s32.totalorder %s34, 0
      %s37 = sadd.s32 %s36, 1
      %s38 = scalar_select %p35, %s36, %s37
      %p40 = pneg %p35
      %p41 = scmp.eq.s32.totalorder %s15, 1
      %p42 = por %p40, %p41
      %p43 = scmp.ne.s32.totalorder %s36, %s39
      %p44 = scmp.eq.s32.totalorder %s15, 0
      %p45 = por %p43, %p44
      %p46 = scmp.ne.s32.totalorder %s36, %s39
      %p47 = scmp.eq.s32.totalorder %s20, 1
      %p48 = por %p46, %p47
      %p50 = scmp.ne.s32.totalorder %s39, %s49
      %p51 = scmp.eq.s32.totalorder %s20, 0
      %p52 = por %p50, %p51
      %p53 = scmp.lt.s32.totalorder %s15, 2
      // Predicated region
      $region9: #{tpu_custom_call.1} parent=5 // pred_check
        %p54 = pneg %p53
      $region10: #{tpu_custom_call.1} parent=5 // pred_check_branch
        %56 = sbr.rel (%p54) target = $region12
      $region11: #{tpu_custom_call.1} parent=5 // pred_region
        %p57 = pneg %p45
        %p58 = pneg %p42
        %s59 = sand.u32 %s36, 1
        %s60 = scalar_lea.sflag [#allocation6], %s59
        %s61 = sand.u32 %s36, 1
        %s62 = smul.addr %s61, 32
        %s63 = scalar_lea.vmem [#allocation5], %s62
        %s64 = smul.u32 %s21, 8
        %s65 = smul.u32 %s22, 128
        %s66 = sld [smem:[#allocation4 + %s64]]
        %s67 = sshra.s32 %s64, 7
        %s68 = sand.u32 %s64, 127
        %s69 = sadd.s32 %s67, 1
        %s70 = smul.u32 %s69, 128
        %s71 = sshra.s32 %s64, 7
        %s72 = sand.u32 %s64, 127
        %s73 = sadd.s32 %s70, %s72
        %s74 = sld [smem:[#allocation4 + %s73]]
        %s75 = sadd.s32 %s67, 2
        %s76 = smul.u32 %s75, 128
        %s77 = sadd.s32 %s76, %s72
        %s78 = sld [smem:[#allocation4 + %s77]]
        %s79 = sadd.s32 %s67, 3
        %s80 = smul.u32 %s79, 128
        %s81 = sadd.s32 %s80, %s72
        %s82 = sld [smem:[#allocation4 + %s81]]
        %s83 = sadd.s32 %s64, 1
        %s84 = sld [smem:[#allocation4 + %s83]]
        %s85 = sshra.s32 %s83, 7
        %s86 = sand.u32 %s83, 127
        %s87 = sadd.s32 %s85, 1
        %s88 = smul.u32 %s87, 128
        %s89 = sshra.s32 %s83, 7
        %s90 = sand.u32 %s83, 127
        %s91 = sadd.s32 %s88, %s90
        %s92 = sld [smem:[#allocation4 + %s91]]
        %s93 = sadd.s32 %s85, 2
        %s94 = smul.u32 %s93, 128
        %s95 = sadd.s32 %s94, %s90
        %s96 = sld [smem:[#allocation4 + %s95]]
        %s97 = sadd.s32 %s85, 3
        %s98 = smul.u32 %s97, 128
        %s99 = sadd.s32 %s98, %s90
        %s100 = sld [smem:[#allocation4 + %s99]]
        %s101 = sadd.s32 %s64, 2
        %s102 = sld [smem:[#allocation4 + %s101]]
        %s103 = sshra.s32 %s101, 7
        %s104 = sand.u32 %s101, 127
        %s105 = sadd.s32 %s103, 1
        %s106 = smul.u32 %s105, 128
        %s107 = sshra.s32 %s101, 7
        %s108 = sand.u32 %s101, 127
        %s109 = sadd.s32 %s106, %s108
        %s110 = sld [smem:[#allocation4 + %s109]]
        %s111 = sadd.s32 %s103, 2
        %s112 = smul.u32 %s111, 128
        %s113 = sadd.s32 %s112, %s108
        %s114 = sld [smem:[#allocation4 + %s113]]
        %s115 = sadd.s32 %s103, 3
        %s116 = smul.u32 %s115, 128
        %s117 = sadd.s32 %s116, %s108
        %s118 = sld [smem:[#allocation4 + %s117]]
        %s119 = sadd.s32 %s64, 3
        %s120 = sld [smem:[#allocation4 + %s119]]
        %s121 = sshra.s32 %s119, 7
        %s122 = sand.u32 %s119, 127
        %s123 = sadd.s32 %s121, 1
        %s124 = smul.u32 %s123, 128
        %s125 = sshra.s32 %s119, 7
        %s126 = sand.u32 %s119, 127
        %s127 = sadd.s32 %s124, %s126
        %s128 = sld [smem:[#allocation4 + %s127]]
        %s129 = sadd.s32 %s121, 2
        %s130 = smul.u32 %s129, 128
        %s131 = sadd.s32 %s130, %s126
        %s132 = sld [smem:[#allocation4 + %s131]]
        %s133 = sadd.s32 %s121, 3
        %s134 = smul.u32 %s133, 128
        %s135 = sadd.s32 %s134, %s126
        %s136 = sld [smem:[#allocation4 + %s135]]
        %s137 = sadd.s32 %s64, 4
        %s138 = sld [smem:[#allocation4 + %s137]]
        %s139 = sshra.s32 %s137, 7
        %s140 = sand.u32 %s137, 127
        %s141 = sadd.s32 %s139, 1
        %s142 = smul.u32 %s141, 128
        %s143 = sshra.s32 %s137, 7
        %s144 = sand.u32 %s137, 127
        %s145 = sadd.s32 %s142, %s144
        %s146 = sld [smem:[#allocation4 + %s145]]
        %s147 = sadd.s32 %s139, 2
        %s148 = smul.u32 %s147, 128
        %s149 = sadd.s32 %s148, %s144
        %s150 = sld [smem:[#allocation4 + %s149]]
        %s151 = sadd.s32 %s139, 3
        %s152 = smul.u32 %s151, 128
        %s153 = sadd.s32 %s152, %s144
        %s154 = sld [smem:[#allocation4 + %s153]]
        %s155 = sadd.s32 %s64, 5
        %s156 = sld [smem:[#allocation4 + %s155]]
        %s157 = sshra.s32 %s155, 7
        %s158 = sand.u32 %s155, 127
        %s159 = sadd.s32 %s157, 1
        %s160 = smul.u32 %s159, 128
        %s161 = sshra.s32 %s155, 7
        %s162 = sand.u32 %s155, 127
        %s163 = sadd.s32 %s160, %s162
        %s164 = sld [smem:[#allocation4 + %s163]]
        %s165 = sadd.s32 %s157, 2
        %s166 = smul.u32 %s165, 128
        %s167 = sadd.s32 %s166, %s162
        %s168 = sld [smem:[#allocation4 + %s167]]
        %s169 = sadd.s32 %s157, 3
        %s170 = smul.u32 %s169, 128
        %s171 = sadd.s32 %s170, %s162
        %s172 = sld [smem:[#allocation4 + %s171]]
        %s173 = sadd.s32 %s64, 6
        %s174 = sld [smem:[#allocation4 + %s173]]
        %s175 = sshra.s32 %s173, 7
        %s176 = sand.u32 %s173, 127
        %s177 = sadd.s32 %s175, 1
        %s178 = smul.u32 %s177, 128
        %s179 = sshra.s32 %s173, 7
        %s180 = sand.u32 %s173, 127
        %s181 = sadd.s32 %s178, %s180
        %s182 = sld [smem:[#allocation4 + %s181]]
        %s183 = sadd.s32 %s175, 2
        %s184 = smul.u32 %s183, 128
        %s185 = sadd.s32 %s184, %s180
        %s186 = sld [smem:[#allocation4 + %s185]]
        %s187 = sadd.s32 %s175, 3
        %s188 = smul.u32 %s187, 128
        %s189 = sadd.s32 %s188, %s180
        %s190 = sld [smem:[#allocation4 + %s189]]
        %s191 = sadd.s32 %s64, 7
        %s192 = sld [smem:[#allocation4 + %s191]]
        %s193 = sshra.s32 %s191, 7
        %s194 = sand.u32 %s191, 127
        %s195 = sadd.s32 %s193, 1
        %s196 = smul.u32 %s195, 128
        %s197 = sshra.s32 %s191, 7
        %s198 = sand.u32 %s191, 127
        %s199 = sadd.s32 %s196, %s198
        %s200 = sld [smem:[#allocation4 + %s199]]
        %s201 = sadd.s32 %s193, 2
        %s202 = smul.u32 %s201, 128
        %s203 = sadd.s32 %s202, %s198
        %s204 = sld [smem:[#allocation4 + %s203]]
        %s205 = sadd.s32 %s193, 3
        %s206 = smul.u32 %s205, 128
        %s207 = sadd.s32 %s206, %s198
        %s208 = sld [smem:[#allocation4 + %s207]]
        %s209 = sshra.s32 %s65, 7
        %s210 = sand.u32 %s65, 127
        %s211 = sadd.s32 %s209, %s64
        %s212 = smul.u32 %s66, 16
        %s213 = sadd.s32 %s211, %s212
        %s214 = smul.addr %s213, 16
        %s215 = scalar_lea.hbm %s1, %s214
        // Predicated region
        $region13: #{tpu_custom_call.1} parent=11 // pred_check
          _
        $region14: #{tpu_custom_call.1} parent=11 // pred_check_branch
          %217 = sbr.rel target = $region16
        $region15: #{tpu_custom_call.1} parent=11 // pred_region
          %218 = sst [smem:[#allocation9]] [#allocation8]
          %219 = sst [smem:[#allocation10]] [#allocation7]
        $region16: #{tpu_custom_call.1} parent=11 // pred_fallthru
          _
        %221 = shalt.err (0)
        %s223 = sshll.u32 %s63, 4
        %s224 = int_to_ptr.vmem [resolvable:$true] %s223
        %226 = dma.hbm_to_vmem [thread:$0]  %s215, 16, %s224, [#allocation2]
        %s227 = smul.u32 %s74, 16
        %s228 = sadd.s32 %s211, %s227
        %s229 = smul.addr %s228, 16
        %s230 = scalar_lea.hbm %s1, %s229
        %s231 = scalar_lea.vmem %s63, 8 [#allocation5]
        // Predicated region
        $region17: #{tpu_custom_call.1} parent=11 // pred_check
          _
        $region18: #{tpu_custom_call.1} parent=11 // pred_check_branch
          %233 = sbr.rel target = $region20
        $region19: #{tpu_custom_call.1} parent=11 // pred_region
          %234 = sst [smem:[#allocation9]] [#allocation12]
          %235 = sst [smem:[#allocation10]] [#allocation11]
        $region20: #{tpu_custom_call.1} parent=11 // pred_fallthru
          _
        %237 = shalt.err (0)
        %s239 = sshll.u32 %s231, 4
        %s240 = int_to_ptr.vmem [resolvable:$true] %s239
        %242 = dma.hbm_to_vmem [thread:$0]  %s230, 16, %s240, [#allocation2]
        %s243 = smul.u32 %s78, 16
        %s244 = sadd.s32 %s211, %s243
        %s245 = smul.addr %s244, 16
        %s246 = scalar_lea.hbm %s1, %s245
        %s247 = scalar_lea.vmem %s63, 16 [#allocation5]
        // Predicated region
        $region21: #{tpu_custom_call.1} parent=11 // pred_check
          _
        $region22: #{tpu_custom_call.1} parent=11 // pred_check_branch
          %249 = sbr.rel target = $region24
        $region23: #{tpu_custom_call.1} parent=11 // pred_region
          %250 = sst [smem:[#allocation9]] [#allocation14]
          %251 = sst [smem:[#allocation10]] [#allocation13]
        $region24: #{tpu_custom_call.1} parent=11 // pred_fallthru
          _
        %253 = shalt.err (0)
        %s255 = sshll.u32 %s247, 4
        %s256 = int_to_ptr.vmem [resolvable:$true] %s255
        %258 = dma.hbm_to_vmem [thread:$0]  %s246, 16, %s256, [#allocation2]
        %s259 = smul.u32 %s82, 16
        %s260 = sadd.s32 %s211, %s259
        %s261 = smul.addr %s260, 16
        %s262 = scalar_lea.hbm %s1, %s261
        %s263 = scalar_lea.vmem %s63, 24 [#allocation5]
        // Predicated region
        $region25: #{tpu_custom_call.1} parent=11 // pred_check
          _
        $region26: #{tpu_custom_call.1} parent=11 // pred_check_branch
          %265 = sbr.rel target = $region28
        $region27: #{tpu_custom_call.1} parent=11 // pred_region
          %266 = sst [smem:[#allocation9]] [#allocation16]
          %267 = sst [smem:[#allocation10]] [#allocation15]
        $region28: #{tpu_custom_call.1} parent=11 // pred_fallthru
          _
        %269 = shalt.err (0)
        %s271 = sshll.u32 %s263, 4
        %s272 = int_to_ptr.vmem [resolvable:$true] %s271
        %274 = dma.hbm_to_vmem [thread:$0]  %s262, 16, %s272, [#allocation2]
        %s275 = sadd.s32 %s209, %s83
        %s276 = smul.u32 %s84, 16
        %s277 = sadd.s32 %s275, %s276
        %s278 = smul.addr %s277, 16
        %s279 = scalar_lea.hbm %s1, %s278
        %s280 = scalar_lea.vmem %s63, 1 [#allocation5]
        %s281 = scalar_lea.sflag [#allocation2], 1
        // Predicated region
        $region29: #{tpu_custom_call.1} parent=11 // pred_check
          _
        $region30: #{tpu_custom_call.1} parent=11 // pred_check_branch
          %283 = sbr.rel target = $region32
        $region31: #{tpu_custom_call.1} parent=11 // pred_region
          %284 = sst [smem:[#allocation9]] [#allocation18]
          %285 = sst [smem:[#allocation10]] [#allocation17]
        $region32: #{tpu_custom_call.1} parent=11 // pred_fallthru
          _
        %287 = shalt.err (0)
        %s289 = sshll.u32 %s280, 4
        %s290 = int_to_ptr.vmem [resolvable:$true] %s289
        %292 = dma.hbm_to_vmem [thread:$0]  %s279, 16, %s290, %s281
        %s293 = smul.u32 %s92, 16
        %s294 = sadd.s32 %s275, %s293
        %s295 = smul.addr %s294, 16
        %s296 = scalar_lea.hbm %s1, %s295
        %s297 = scalar_lea.vmem %s63, 9 [#allocation5]
        // Predicated region
        $region33: #{tpu_custom_call.1} parent=11 // pred_check
          _
        $region34: #{tpu_custom_call.1} parent=11 // pred_check_branch
          %299 = sbr.rel target = $region36
        $region35: #{tpu_custom_call.1} parent=11 // pred_region
          %300 = sst [smem:[#allocation9]] [#allocation20]
          %301 = sst [smem:[#allocation10]] [#allocation19]
        $region36: #{tpu_custom_call.1} parent=11 // pred_fallthru
          _
        %303 = shalt.err (0)
        %s305 = sshll.u32 %s297, 4
        %s306 = int_to_ptr.vmem [resolvable:$true] %s305
        %308 = dma.hbm_to_vmem [thread:$0]  %s296, 16, %s306, %s281
        %s309 = smul.u32 %s96, 16
        %s310 = sadd.s32 %s275, %s309
        %s311 = smul.addr %s310, 16
        %s312 = scalar_lea.hbm %s1, %s311
        %s313 = scalar_lea.vmem %s63, 17 [#allocation5]
        // Predicated region
        $region37: #{tpu_custom_call.1} parent=11 // pred_check
          _
        $region38: #{tpu_custom_call.1} parent=11 // pred_check_branch
          %315 = sbr.rel target = $region40
        $region39: #{tpu_custom_call.1} parent=11 // pred_region
          %316 = sst [smem:[#allocation9]] [#allocation22]
          %317 = sst [smem:[#allocation10]] [#allocation21]
        $region40: #{tpu_custom_call.1} parent=11 // pred_fallthru
          _
        %319 = shalt.err (0)
        %s321 = sshll.u32 %s313, 4
        %s322 = int_to_ptr.vmem [resolvable:$true] %s321
        %324 = dma.hbm_to_vmem [thread:$0]  %s312, 16, %s322, %s281
        %s325 = smul.u32 %s100, 16
        %s326 = sadd.s32 %s275, %s325
        %s327 = smul.addr %s326, 16
        %s328 = scalar_lea.hbm %s1, %s327
        %s329 = scalar_lea.vmem %s63, 25 [#allocation5]
        // Predicated region
        $region41: #{tpu_custom_call.1} parent=11 // pred_check
          _
        $region42: #{tpu_custom_call.1} parent=11 // pred_check_branch
          %331 = sbr.rel target = $region44
        $region43: #{tpu_custom_call.1} parent=11 // pred_region
          %332 = sst [smem:[#allocation9]] [#allocation24]
          %333 = sst [smem:[#allocation10]] [#allocation23]
        $region44: #{tpu_custom_call.1} parent=11 // pred_fallthru
          _
        %335 = shalt.err (0)
        %s337 = sshll.u32 %s329, 4
        %s338 = int_to_ptr.vmem [resolvable:$true] %s337
        %340 = dma.hbm_to_vmem [thread:$0]  %s328, 16, %s338, %s281
        %s341 = sadd.s32 %s209, %s101
        %s342 = smul.u32 %s102, 16
        %s343 = sadd.s32 %s341, %s342
        %s344 = smul.addr %s343, 16
        %s345 = scalar_lea.hbm %s1, %s344
        %s346 = scalar_lea.vmem %s63, 2 [#allocation5]
        %s347 = scalar_lea.sflag [#allocation2], 2
        // Predicated region
        $region45: #{tpu_custom_call.1} parent=11 // pred_check
          _
        $region46: #{tpu_custom_call.1} parent=11 // pred_check_branch
          %349 = sbr.rel target = $region48
        $region47: #{tpu_custom_call.1} parent=11 // pred_region
          %350 = sst [smem:[#allocation9]] [#allocation26]
          %351 = sst [smem:[#allocation10]] [#allocation25]
        $region48: #{tpu_custom_call.1} parent=11 // pred_fallthru
          _
        %353 = shalt.err (0)
        %s355 = sshll.u32 %s346, 4
        %s356 = int_to_ptr.vmem [resolvable:$true] %s355
        %358 = dma.hbm_to_vmem [thread:$0]  %s345, 16, %s356, %s347
        %s359 = smul.u32 %s110, 16
        %s360 = sadd.s32 %s341, %s359
        %s361 = smul.addr %s360, 16
        %s362 = scalar_lea.hbm %s1, %s361
        %s363 = scalar_lea.vmem %s63, 10 [#allocation5]
        // Predicated region
        $region49: #{tpu_custom_call.1} parent=11 // pred_check
          _
        $region50: #{tpu_custom_call.1} parent=11 // pred_check_branch
          %365 = sbr.rel target = $region52
        $region51: #{tpu_custom_call.1} parent=11 // pred_region
          %366 = sst [smem:[#allocation9]] [#allocation28]
          %367 = sst [smem:[#allocation10]] [#allocation27]
        $region52: #{tpu_custom_call.1} parent=11 // pred_fallthru
          _
        %369 = shalt.err (0)
        %s371 = sshll.u32 %s363, 4
        %s372 = int_to_ptr.vmem [resolvable:$true] %s371
        %374 = dma.hbm_to_vmem [thread:$0]  %s362, 16, %s372, %s347
        %s375 = smul.u32 %s114, 16
        %s376 = sadd.s32 %s341, %s375
        %s377 = smul.addr %s376, 16
        %s378 = scalar_lea.hbm %s1, %s377
        %s379 = scalar_lea.vmem %s63, 18 [#allocation5]
        // Predicated region
        $region53: #{tpu_custom_call.1} parent=11 // pred_check
          _
        $region54: #{tpu_custom_call.1} parent=11 // pred_check_branch
          %381 = sbr.rel target = $region56
        $region55: #{tpu_custom_call.1} parent=11 // pred_region
          %382 = sst [smem:[#allocation9]] [#allocation30]
          %383 = sst [smem:[#allocation10]] [#allocation29]
        $region56: #{tpu_custom_call.1} parent=11 // pred_fallthru
          _
        %385 = shalt.err (0)
        %s387 = sshll.u32 %s379, 4
        %s388 = int_to_ptr.vmem [resolvable:$true] %s387
        %390 = dma.hbm_to_vmem [thread:$0]  %s378, 16, %s388, %s347
        %s391 = smul.u32 %s118, 16
        %s392 = sadd.s32 %s341, %s391
        %s393 = smul.addr %s392, 16
        %s394 = scalar_lea.hbm %s1, %s393
        %s395 = scalar_lea.vmem %s63, 26 [#allocation5]
        // Predicated region
        $region57: #{tpu_custom_call.1} parent=11 // pred_check
          _
        $region58: #{tpu_custom_call.1} parent=11 // pred_check_branch
          %397 = sbr.rel target = $region60
        $region59: #{tpu_custom_call.1} parent=11 // pred_region
          %398 = sst [smem:[#allocation9]] [#allocation32]
          %399 = sst [smem:[#allocation10]] [#allocation31]
        $region60: #{tpu_custom_call.1} parent=11 // pred_fallthru
          _
        %401 = shalt.err (0)
        %s403 = sshll.u32 %s395, 4
        %s404 = int_to_ptr.vmem [resolvable:$true] %s403
        %406 = dma.hbm_to_vmem [thread:$0]  %s394, 16, %s404, %s347
        %s407 = sadd.s32 %s209, %s119
        %s408 = smul.u32 %s120, 16
        %s409 = sadd.s32 %s407, %s408
        %s410 = smul.addr %s409, 16
        %s411 = scalar_lea.hbm %s1, %s410
        %s412 = scalar_lea.vmem %s63, 3 [#allocation5]
        %s413 = scalar_lea.sflag [#allocation2], 3
        // Predicated region
        $region61: #{tpu_custom_call.1} parent=11 // pred_check
          _
        $region62: #{tpu_custom_call.1} parent=11 // pred_check_branch
          %415 = sbr.rel target = $region64
        $region63: #{tpu_custom_call.1} parent=11 // pred_region
          %416 = sst [smem:[#allocation9]] [#allocation34]
          %417 = sst [smem:[#allocation10]] [#allocation33]
        $region64: #{tpu_custom_call.1} parent=11 // pred_fallthru
          _
        %419 = shalt.err (0)
        %s421 = sshll.u32 %s412, 4
        %s422 = int_to_ptr.vmem [resolvable:$true] %s421
        %424 = dma.hbm_to_vmem [thread:$0]  %s411, 16, %s422, %s413
        %s425 = smul.u32 %s128, 16
        %s426 = sadd.s32 %s407, %s425
        %s427 = smul.addr %s426, 16
        %s428 = scalar_lea.hbm %s1, %s427
        %s429 = scalar_lea.vmem %s63, 11 [#allocation5]
        // Predicated region
        $region65: #{tpu_custom_call.1} parent=11 // pred_check
          _
        $region66: #{tpu_custom_call.1} parent=11 // pred_check_branch
          %431 = sbr.rel target = $region68
        $region67: #{tpu_custom_call.1} parent=11 // pred_region
          %432 = sst [smem:[#allocation9]] [#allocation36]
          %433 = sst [smem:[#allocation10]] [#allocation35]
        $region68: #{tpu_custom_call.1} parent=11 // pred_fallthru
          _
        %435 = shalt.err (0)
        %s437 = sshll.u32 %s429, 4
        %s438 = int_to_ptr.vmem [resolvable:$true] %s437
        %440 = dma.hbm_to_vmem [thread:$0]  %s428, 16, %s438, %s413
        %s441 = smul.u32 %s132, 16
        %s442 = sadd.s32 %s407, %s441
        %s443 = smul.addr %s442, 16
        %s444 = scalar_lea.hbm %s1, %s443
        %s445 = scalar_lea.vmem %s63, 19 [#allocation5]
        // Predicated region
        $region69: #{tpu_custom_call.1} parent=11 // pred_check
          _
        $region70: #{tpu_custom_call.1} parent=11 // pred_check_branch
          %447 = sbr.rel target = $region72
        $region71: #{tpu_custom_call.1} parent=11 // pred_region
          %448 = sst [smem:[#allocation9]] [#allocation38]
          %449 = sst [smem:[#allocation10]] [#allocation37]
        $region72: #{tpu_custom_call.1} parent=11 // pred_fallthru
          _
        %451 = shalt.err (0)
        %s453 = sshll.u32 %s445, 4
        %s454 = int_to_ptr.vmem [resolvable:$true] %s453
        %456 = dma.hbm_to_vmem [thread:$0]  %s444, 16, %s454, %s413
        %s457 = smul.u32 %s136, 16
        %s458 = sadd.s32 %s407, %s457
        %s459 = smul.addr %s458, 16
        %s460 = scalar_lea.hbm %s1, %s459
        %s461 = scalar_lea.vmem %s63, 27 [#allocation5]
        // Predicated region
        $region73: #{tpu_custom_call.1} parent=11 // pred_check
          _
        $region74: #{tpu_custom_call.1} parent=11 // pred_check_branch
          %463 = sbr.rel target = $region76
        $region75: #{tpu_custom_call.1} parent=11 // pred_region
          %464 = sst [smem:[#allocation9]] [#allocation40]
          %465 = sst [smem:[#allocation10]] [#allocation39]
        $region76: #{tpu_custom_call.1} parent=11 // pred_fallthru
          _
        %467 = shalt.err (0)
        %s469 = sshll.u32 %s461, 4
        %s470 = int_to_ptr.vmem [resolvable:$true] %s469
        %472 = dma.hbm_to_vmem [thread:$0]  %s460, 16, %s470, %s413
        %s473 = sadd.s32 %s209, %s137
        %s474 = smul.u32 %s138, 16
        %s475 = sadd.s32 %s473, %s474
        %s476 = smul.addr %s475, 16
        %s477 = scalar_lea.hbm %s1, %s476
        %s478 = scalar_lea.vmem %s63, 4 [#allocation5]
        %s479 = scalar_lea.sflag [#allocation2], 4
        // Predicated region
        $region77: #{tpu_custom_call.1} parent=11 // pred_check
          _
        $region78: #{tpu_custom_call.1} parent=11 // pred_check_branch
          %481 = sbr.rel target = $region80
        $region79: #{tpu_custom_call.1} parent=11 // pred_region
          %482 = sst [smem:[#allocation9]] [#allocation42]
          %483 = sst [smem:[#allocation10]] [#allocation41]
        $region80: #{tpu_custom_call.1} parent=11 // pred_fallthru
          _
        %485 = shalt.err (0)
        %s487 = sshll.u32 %s478, 4
        %s488 = int_to_ptr.vmem [resolvable:$true] %s487
        %490 = dma.hbm_to_vmem [thread:$0]  %s477, 16, %s488, %s479
        %s491 = smul.u32 %s146, 16
        %s492 = sadd.s32 %s473, %s491
        %s493 = smul.addr %s492, 16
        %s494 = scalar_lea.hbm %s1, %s493
        %s495 = scalar_lea.vmem %s63, 12 [#allocation5]
        // Predicated region
        $region81: #{tpu_custom_call.1} parent=11 // pred_check
          _
        $region82: #{tpu_custom_call.1} parent=11 // pred_check_branch
          %497 = sbr.rel target = $region84
        $region83: #{tpu_custom_call.1} parent=11 // pred_region
          %498 = sst [smem:[#allocation9]] [#allocation44]
          %499 = sst [smem:[#allocation10]] [#allocation43]
        $region84: #{tpu_custom_call.1} parent=11 // pred_fallthru
          _
        %501 = shalt.err (0)
        %s503 = sshll.u32 %s495, 4
        %s504 = int_to_ptr.vmem [resolvable:$true] %s503
        %506 = dma.hbm_to_vmem [thread:$0]  %s494, 16, %s504, %s479
        %s507 = smul.u32 %s150, 16
        %s508 = sadd.s32 %s473, %s507
        %s509 = smul.addr %s508, 16
        %s510 = scalar_lea.hbm %s1, %s509
        %s511 = scalar_lea.vmem %s63, 20 [#allocation5]
        // Predicated region
        $region85: #{tpu_custom_call.1} parent=11 // pred_check
          _
        $region86: #{tpu_custom_call.1} parent=11 // pred_check_branch
          %513 = sbr.rel target = $region88
        $region87: #{tpu_custom_call.1} parent=11 // pred_region
          %514 = sst [smem:[#allocation9]] [#allocation46]
          %515 = sst [smem:[#allocation10]] [#allocation45]
        $region88: #{tpu_custom_call.1} parent=11 // pred_fallthru
          _
        %517 = shalt.err (0)
        %s519 = sshll.u32 %s511, 4
        %s520 = int_to_ptr.vmem [resolvable:$true] %s519
        %522 = dma.hbm_to_vmem [thread:$0]  %s510, 16, %s520, %s479
        %s523 = smul.u32 %s154, 16
        %s524 = sadd.s32 %s473, %s523
        %s525 = smul.addr %s524, 16
        %s526 = scalar_lea.hbm %s1, %s525
        %s527 = scalar_lea.vmem %s63, 28 [#allocation5]
        // Predicated region
        $region89: #{tpu_custom_call.1} parent=11 // pred_check
          _
        $region90: #{tpu_custom_call.1} parent=11 // pred_check_branch
          %529 = sbr.rel target = $region92
        $region91: #{tpu_custom_call.1} parent=11 // pred_region
          %530 = sst [smem:[#allocation9]] [#allocation48]
          %531 = sst [smem:[#allocation10]] [#allocation47]
        $region92: #{tpu_custom_call.1} parent=11 // pred_fallthru
          _
        %533 = shalt.err (0)
        %s535 = sshll.u32 %s527, 4
        %s536 = int_to_ptr.vmem [resolvable:$true] %s535
        %538 = dma.hbm_to_vmem [thread:$0]  %s526, 16, %s536, %s479
        %s539 = sadd.s32 %s209, %s155
        %s540 = smul.u32 %s156, 16
        %s541 = sadd.s32 %s539, %s540
        %s542 = smul.addr %s541, 16
        %s543 = scalar_lea.hbm %s1, %s542
        %s544 = scalar_lea.vmem %s63, 5 [#allocation5]
        %s545 = scalar_lea.sflag [#allocation2], 5
        // Predicated region
        $region93: #{tpu_custom_call.1} parent=11 // pred_check
          _
        $region94: #{tpu_custom_call.1} parent=11 // pred_check_branch
          %547 = sbr.rel target = $region96
        $region95: #{tpu_custom_call.1} parent=11 // pred_region
          %548 = sst [smem:[#allocation9]] [#allocation50]
          %549 = sst [smem:[#allocation10]] [#allocation49]
        $region96: #{tpu_custom_call.1} parent=11 // pred_fallthru
          _
        %551 = shalt.err (0)
        %s553 = sshll.u32 %s544, 4
        %s554 = int_to_ptr.vmem [resolvable:$true] %s553
        %556 = dma.hbm_to_vmem [thread:$0]  %s543, 16, %s554, %s545
        %s557 = smul.u32 %s164, 16
        %s558 = sadd.s32 %s539, %s557
        %s559 = smul.addr %s558, 16
        %s560 = scalar_lea.hbm %s1, %s559
        %s561 = scalar_lea.vmem %s63, 13 [#allocation5]
        // Predicated region
        $region97: #{tpu_custom_call.1} parent=11 // pred_check
          _
        $region98: #{tpu_custom_call.1} parent=11 // pred_check_branch
          %563 = sbr.rel target = $region100
        $region99: #{tpu_custom_call.1} parent=11 // pred_region
          %564 = sst [smem:[#allocation9]] [#allocation52]
          %565 = sst [smem:[#allocation10]] [#allocation51]
        $region100: #{tpu_custom_call.1} parent=11 // pred_fallthru
          _
        %567 = shalt.err (0)
        %s569 = sshll.u32 %s561, 4
        %s570 = int_to_ptr.vmem [resolvable:$true] %s569
        %572 = dma.hbm_to_vmem [thread:$0]  %s560, 16, %s570, %s545
        %s573 = smul.u32 %s168, 16
        %s574 = sadd.s32 %s539, %s573
        %s575 = smul.addr %s574, 16
        %s576 = scalar_lea.hbm %s1, %s575
        %s577 = scalar_lea.vmem %s63, 21 [#allocation5]
        // Predicated region
        $region101: #{tpu_custom_call.1} parent=11 // pred_check
          _
        $region102: #{tpu_custom_call.1} parent=11 // pred_check_branch
          %579 = sbr.rel target = $region104
        $region103: #{tpu_custom_call.1} parent=11 // pred_region
          %580 = sst [smem:[#allocation9]] [#allocation54]
          %581 = sst [smem:[#allocation10]] [#allocation53]
        $region104: #{tpu_custom_call.1} parent=11 // pred_fallthru
          _
        %583 = shalt.err (0)
        %s585 = sshll.u32 %s577, 4
        %s586 = int_to_ptr.vmem [resolvable:$true] %s585
        %588 = dma.hbm_to_vmem [thread:$0]  %s576, 16, %s586, %s545
        %s589 = smul.u32 %s172, 16
        %s590 = sadd.s32 %s539, %s589
        %s591 = smul.addr %s590, 16
        %s592 = scalar_lea.hbm %s1, %s591
        %s593 = scalar_lea.vmem %s63, 29 [#allocation5]
        // Predicated region
        $region105: #{tpu_custom_call.1} parent=11 // pred_check
          _
        $region106: #{tpu_custom_call.1} parent=11 // pred_check_branch
          %595 = sbr.rel target = $region108
        $region107: #{tpu_custom_call.1} parent=11 // pred_region
          %596 = sst [smem:[#allocation9]] [#allocation56]
          %597 = sst [smem:[#allocation10]] [#allocation55]
        $region108: #{tpu_custom_call.1} parent=11 // pred_fallthru
          _
        %599 = shalt.err (0)
        %s601 = sshll.u32 %s593, 4
        %s602 = int_to_ptr.vmem [resolvable:$true] %s601
        %604 = dma.hbm_to_vmem [thread:$0]  %s592, 16, %s602, %s545
        %s605 = sadd.s32 %s209, %s173
        %s606 = smul.u32 %s174, 16
        %s607 = sadd.s32 %s605, %s606
        %s608 = smul.addr %s607, 16
        %s609 = scalar_lea.hbm %s1, %s608
        %s610 = scalar_lea.vmem %s63, 6 [#allocation5]
        %s611 = scalar_lea.sflag [#allocation2], 6
        // Predicated region
        $region109: #{tpu_custom_call.1} parent=11 // pred_check
          _
        $region110: #{tpu_custom_call.1} parent=11 // pred_check_branch
          %613 = sbr.rel target = $region112
        $region111: #{tpu_custom_call.1} parent=11 // pred_region
          %614 = sst [smem:[#allocation9]] [#allocation58]
          %615 = sst [smem:[#allocation10]] [#allocation57]
        $region112: #{tpu_custom_call.1} parent=11 // pred_fallthru
          _
        %617 = shalt.err (0)
        %s619 = sshll.u32 %s610, 4
        %s620 = int_to_ptr.vmem [resolvable:$true] %s619
        %622 = dma.hbm_to_vmem [thread:$0]  %s609, 16, %s620, %s611
        %s623 = smul.u32 %s182, 16
        %s624 = sadd.s32 %s605, %s623
        %s625 = smul.addr %s624, 16
        %s626 = scalar_lea.hbm %s1, %s625
        %s627 = scalar_lea.vmem %s63, 14 [#allocation5]
        // Predicated region
        $region113: #{tpu_custom_call.1} parent=11 // pred_check
          _
        $region114: #{tpu_custom_call.1} parent=11 // pred_check_branch
          %629 = sbr.rel target = $region116
        $region115: #{tpu_custom_call.1} parent=11 // pred_region
          %630 = sst [smem:[#allocation9]] [#allocation60]
          %631 = sst [smem:[#allocation10]] [#allocation59]
        $region116: #{tpu_custom_call.1} parent=11 // pred_fallthru
          _
        %633 = shalt.err (0)
        %s635 = sshll.u32 %s627, 4
        %s636 = int_to_ptr.vmem [resolvable:$true] %s635
        %638 = dma.hbm_to_vmem [thread:$0]  %s626, 16, %s636, %s611
        %s639 = smul.u32 %s186, 16
        %s640 = sadd.s32 %s605, %s639
        %s641 = smul.addr %s640, 16
        %s642 = scalar_lea.hbm %s1, %s641
        %s643 = scalar_lea.vmem %s63, 22 [#allocation5]
        // Predicated region
        $region117: #{tpu_custom_call.1} parent=11 // pred_check
          _
        $region118: #{tpu_custom_call.1} parent=11 // pred_check_branch
          %645 = sbr.rel target = $region120
        $region119: #{tpu_custom_call.1} parent=11 // pred_region
          %646 = sst [smem:[#allocation9]] [#allocation62]
          %647 = sst [smem:[#allocation10]] [#allocation61]
        $region120: #{tpu_custom_call.1} parent=11 // pred_fallthru
          _
        %649 = shalt.err (0)
        %s651 = sshll.u32 %s643, 4
        %s652 = int_to_ptr.vmem [resolvable:$true] %s651
        %654 = dma.hbm_to_vmem [thread:$0]  %s642, 16, %s652, %s611
        %s655 = smul.u32 %s190, 16
        %s656 = sadd.s32 %s605, %s655
        %s657 = smul.addr %s656, 16
        %s658 = scalar_lea.hbm %s1, %s657
        %s659 = scalar_lea.vmem %s63, 30 [#allocation5]
        // Predicated region
        $region121: #{tpu_custom_call.1} parent=11 // pred_check
          _
        $region122: #{tpu_custom_call.1} parent=11 // pred_check_branch
          %661 = sbr.rel target = $region124
        $region123: #{tpu_custom_call.1} parent=11 // pred_region
          %662 = sst [smem:[#allocation9]] [#allocation64]
          %663 = sst [smem:[#allocation10]] [#allocation63]
        $region124: #{tpu_custom_call.1} parent=11 // pred_fallthru
          _
        %665 = shalt.err (0)
        %s667 = sshll.u32 %s659, 4
        %s668 = int_to_ptr.vmem [resolvable:$true] %s667
        %670 = dma.hbm_to_vmem [thread:$0]  %s658, 16, %s668, %s611
        %s671 = sadd.s32 %s209, %s191
        %s672 = smul.u32 %s192, 16
        %s673 = sadd.s32 %s671, %s672
        %s674 = smul.addr %s673, 16
        %s675 = scalar_lea.hbm %s1, %s674
        %s676 = scalar_lea.vmem %s63, 7 [#allocation5]
        %s677 = scalar_lea.sflag [#allocation2], 7
        // Predicated region
        $region125: #{tpu_custom_call.1} parent=11 // pred_check
          _
        $region126: #{tpu_custom_call.1} parent=11 // pred_check_branch
          %679 = sbr.rel target = $region128
        $region127: #{tpu_custom_call.1} parent=11 // pred_region
          %680 = sst [smem:[#allocation9]] [#allocation66]
          %681 = sst [smem:[#allocation10]] [#allocation65]
        $region128: #{tpu_custom_call.1} parent=11 // pred_fallthru
          _
        %683 = shalt.err (0)
        %s685 = sshll.u32 %s676, 4
        %s686 = int_to_ptr.vmem [resolvable:$true] %s685
        %688 = dma.hbm_to_vmem [thread:$0]  %s675, 16, %s686, %s677
        %s689 = smul.u32 %s200, 16
        %s690 = sadd.s32 %s671, %s689
        %s691 = smul.addr %s690, 16
        %s692 = scalar_lea.hbm %s1, %s691
        %s693 = scalar_lea.vmem %s63, 15 [#allocation5]
        // Predicated region
        $region129: #{tpu_custom_call.1} parent=11 // pred_check
          _
        $region130: #{tpu_custom_call.1} parent=11 // pred_check_branch
          %695 = sbr.rel target = $region132
        $region131: #{tpu_custom_call.1} parent=11 // pred_region
          %696 = sst [smem:[#allocation9]] [#allocation68]
          %697 = sst [smem:[#allocation10]] [#allocation67]
        $region132: #{tpu_custom_call.1} parent=11 // pred_fallthru
          _
        %699 = shalt.err (0)
        %s701 = sshll.u32 %s693, 4
        %s702 = int_to_ptr.vmem [resolvable:$true] %s701
        %704 = dma.hbm_to_vmem [thread:$0]  %s692, 16, %s702, %s677
        %s705 = smul.u32 %s204, 16
        %s706 = sadd.s32 %s671, %s705
        %s707 = smul.addr %s706, 16
        %s708 = scalar_lea.hbm %s1, %s707
        %s709 = scalar_lea.vmem %s63, 23 [#allocation5]
        // Predicated region
        $region133: #{tpu_custom_call.1} parent=11 // pred_check
          _
        $region134: #{tpu_custom_call.1} parent=11 // pred_check_branch
          %711 = sbr.rel target = $region136
        $region135: #{tpu_custom_call.1} parent=11 // pred_region
          %712 = sst [smem:[#allocation9]] [#allocation70]
          %713 = sst [smem:[#allocation10]] [#allocation69]
        $region136: #{tpu_custom_call.1} parent=11 // pred_fallthru
          _
        %715 = shalt.err (0)
        %s717 = sshll.u32 %s709, 4
        %s718 = int_to_ptr.vmem [resolvable:$true] %s717
        %720 = dma.hbm_to_vmem [thread:$0]  %s708, 16, %s718, %s677
        %s721 = smul.u32 %s208, 16
        %s722 = sadd.s32 %s671, %s721
        %s723 = smul.addr %s722, 16
        %s724 = scalar_lea.hbm %s1, %s723
        %s725 = scalar_lea.vmem %s63, 31 [#allocation5]
        // Predicated region
        $region137: #{tpu_custom_call.1} parent=11 // pred_check
          _
        $region138: #{tpu_custom_call.1} parent=11 // pred_check_branch
          %727 = sbr.rel target = $region140
        $region139: #{tpu_custom_call.1} parent=11 // pred_region
          %728 = sst [smem:[#allocation9]] [#allocation72]
          %729 = sst [smem:[#allocation10]] [#allocation71]
        $region140: #{tpu_custom_call.1} parent=11 // pred_fallthru
          _
        %731 = shalt.err (0)
        %s733 = sshll.u32 %s725, 4
        %s734 = int_to_ptr.vmem [resolvable:$true] %s733
        %736 = dma.hbm_to_vmem [thread:$0]  %s724, 16, %s734, %s677
        %s737 = smul.u32 1, 1
        %s738 = sshll.u32 %s737, 4
        %739 = dma.done [#allocation2], %s738
        %s740 = sshll.u32 %s737, 4
        %741 = dma.done [#allocation2], %s740
        %s742 = sshll.u32 %s737, 4
        %743 = dma.done [#allocation2], %s742
        %s744 = sshll.u32 %s737, 4
        %745 = dma.done [#allocation2], %s744
        %s746 = sshll.u32 %s737, 4
        %747 = dma.done %s281, %s746
        %s748 = sshll.u32 %s737, 4
        %749 = dma.done %s281, %s748
        %s750 = sshll.u32 %s737, 4
        %751 = dma.done %s281, %s750
        %s752 = sshll.u32 %s737, 4
        %753 = dma.done %s281, %s752
        %s754 = sshll.u32 %s737, 4
        %755 = dma.done %s347, %s754
        %s756 = sshll.u32 %s737, 4
        %757 = dma.done %s347, %s756
        %s758 = sshll.u32 %s737, 4
        %759 = dma.done %s347, %s758
        %s760 = sshll.u32 %s737, 4
        %761 = dma.done %s347, %s760
        %s762 = sshll.u32 %s737, 4
        %763 = dma.done %s413, %s762
        %s764 = sshll.u32 %s737, 4
        %765 = dma.done %s413, %s764
        %s766 = sshll.u32 %s737, 4
        %767 = dma.done %s413, %s766
        %s768 = sshll.u32 %s737, 4
        %769 = dma.done %s413, %s768
        %s770 = sshll.u32 %s737, 4
        %771 = dma.done %s479, %s770
        %s772 = sshll.u32 %s737, 4
        %773 = dma.done %s479, %s772
        %s774 = sshll.u32 %s737, 4
        %775 = dma.done %s479, %s774
        %s776 = sshll.u32 %s737, 4
        %777 = dma.done %s479, %s776
        %s778 = sshll.u32 %s737, 4
        %779 = dma.done %s545, %s778
        %s780 = sshll.u32 %s737, 4
        %781 = dma.done %s545, %s780
        %s782 = sshll.u32 %s737, 4
        %783 = dma.done %s545, %s782
        %s784 = sshll.u32 %s737, 4
        %785 = dma.done %s545, %s784
        %s786 = sshll.u32 %s737, 4
        %787 = dma.done %s611, %s786
        %s788 = sshll.u32 %s737, 4
        %789 = dma.done %s611, %s788
        %s790 = sshll.u32 %s737, 4
        %791 = dma.done %s611, %s790
        %s792 = sshll.u32 %s737, 4
        %793 = dma.done %s611, %s792
        %s794 = sshll.u32 %s737, 4
        %795 = dma.done %s677, %s794
        %s796 = sshll.u32 %s737, 4
        %797 = dma.done %s677, %s796
        %s798 = sshll.u32 %s737, 4
        %799 = dma.done %s677, %s798
        %s800 = sshll.u32 %s737, 4
        %801 = dma.done %s677, %s800
        %s802 = sand.u32 %s36, 1
        %s803 = scalar_lea.sflag [#allocation6], %s802
        %s804 = sand.u32 %s36, 1
        %s805 = smul.addr %s804, 32
        %s806 = scalar_lea.vmem [#allocation5], %s805
        // Predicated region
        $region141: #{tpu_custom_call.1} parent=11 // pred_check
          %p807 = pneg %p42
        $region142: #{tpu_custom_call.1} parent=11 // pred_check_branch
          %809 = sbr.rel (%p807) target = $region144
        $region143: #{tpu_custom_call.1} parent=11 // pred_region
          %s811 = ssub.s32 512, 512
          %812 = vsyncadd %s803, %s811
          %s813 = sadd.s32 %s22, %s21
          %s814 = smul.addr %s813, 128
          %s815 = scalar_lea.hbm %s2, %s814
          %s816 = sshll.u32 %s806, 4
          %s817 = int_to_ptr.vmem [resolvable:$true] %s816
          %822 = dma.vmem_to_hbm [thread:$0]  %s817, 512, %s815, %s803, 128, 256, 8
        $region144: #{tpu_custom_call.1} parent=11 // pred_fallthru
          _
      $region12: #{tpu_custom_call.1} parent=5 // pred_fallthru
        _
      %p823 = scmp.le.s32.totalorder 1, %s15
      // Predicated region
      $region145: #{tpu_custom_call.1} parent=5 // pred_check
        %p824 = pneg %p823
      $region146: #{tpu_custom_call.1} parent=5 // pred_check_branch
        %826 = sbr.rel (%p824) target = $region148
      $region147: #{tpu_custom_call.1} parent=5 // pred_region
        %s827 = ssub.s32 %s15, 1
        // Predicated region
        $region149: #{tpu_custom_call.1} parent=147 // pred_check
          %p828 = pneg %p48
        $region150: #{tpu_custom_call.1} parent=147 // pred_check_branch
          %830 = sbr.rel (%p828) target = $region152
        $region151: #{tpu_custom_call.1} parent=147 // pred_region
          %s831 = sand.u32 %s39, 1
          %s832 = scalar_lea.sflag [#allocation6], %s831
          %s833 = sand.u32 %s39, 1
          %s834 = smul.addr %s833, 32
          %s835 = scalar_lea.vmem [#allocation5], %s834
          %836 = dma.done %s832, 512
        $region152: #{tpu_custom_call.1} parent=147 // pred_fallthru
          _
      $region148: #{tpu_custom_call.1} parent=5 // pred_fallthru
        _
    $region6: #{tpu_custom_call.1} parent=1 // loop_footer
      %s19 = sadd.s32 1, %s15
    $region7: #{tpu_custom_call.1} parent=1 // loop_footer_branch
      %14 = sbr.rel target = $region3
    $region8: #{tpu_custom_call.1} parent=1 // loop_exit
      _
    %837 = vsyncpa [#allocation6], 1
    %s838 = scalar_lea.sflag [#allocation6], 1
    %839 = vsyncpa %s838, 1
  %840 = vsyncmov [#allocation2]
  %s841 = vpop.sfrf %840
  %p842 = scmp.eq.s32.totalorder %s841, 0
  %p843 = pneg %p842
  %845 = shalt.err (%p843)
  %s846 = scalar_lea.sflag [#allocation2], 1
  %847 = vsyncmov %s846
  %s848 = vpop.sfrf %847
  %p849 = scmp.eq.s32.totalorder %s848, 0
  %p850 = pneg %p849
  %852 = shalt.err (%p850)
  %s853 = scalar_lea.sflag [#allocation2], 2
  %854 = vsyncmov %s853
  %s855 = vpop.sfrf %854
  %p856 = scmp.eq.s32.totalorder %s855, 0
  %p857 = pneg %p856
  %859 = shalt.err (%p857)
  %s860 = scalar_lea.sflag [#allocation2], 3
  %861 = vsyncmov %s860
  %s862 = vpop.sfrf %861
  %p863 = scmp.eq.s32.totalorder %s862, 0
  %p864 = pneg %p863
  %866 = shalt.err (%p864)
  %s867 = scalar_lea.sflag [#allocation2], 4
  %868 = vsyncmov %s867
  %s869 = vpop.sfrf %868
  %p870 = scmp.eq.s32.totalorder %s869, 0
  %p871 = pneg %p870
  %873 = shalt.err (%p871)
  %s874 = scalar_lea.sflag [#allocation2], 5
  %875 = vsyncmov %s874
  %s876 = vpop.sfrf %875
  %p877 = scmp.eq.s32.totalorder %s876, 0
  %p878 = pneg %p877
  %880 = shalt.err (%p878)
  %s881 = scalar_lea.sflag [#allocation2], 6
  %882 = vsyncmov %s881
  %s883 = vpop.sfrf %882
  %p884 = scmp.eq.s32.totalorder %s883, 0
  %p885 = pneg %p884
  %887 = shalt.err (%p885)
  %s888 = scalar_lea.sflag [#allocation2], 7
  %889 = vsyncmov %s888
  %s890 = vpop.sfrf %889
  %p891 = scmp.eq.s32.totalorder %s890, 0
  %p892 = pneg %p891
  %894 = shalt.err (%p892)

</llo_original>
